<compile_context>
chip_gen: v7x
topology: tpu7x:2x2x1
jax: 0.10.0
libtpu: 0.0.40
codegen_flags: <defaults>
</compile_context>

<pallas_src>
import functools

import numpy as np
import jax
import jax.numpy as jnp
from jax import lax
from jax.experimental import pallas as pl
from jax.experimental.pallas import tpu as pltpu

NEG_SLOPE = 0.02  # LeakyReLU negative_slope


# ----------------------------- helpers (jnp, usable in/out of kernel) --------

def _leaky_relu(x):
    return jnp.where(x >= 0.0, x, NEG_SLOPE * x)


def _mlp3(x, w0, b0, w1, b1, w2, b2):
    h = _leaky_relu(jnp.dot(x, w0, preferred_element_type=jnp.float32) + b0)
    h = _leaky_relu(jnp.dot(h, w1, preferred_element_type=jnp.float32) + b1)
    return jnp.dot(h, w2, preferred_element_type=jnp.float32) + b2


def _dot_nt(a, b):
    """a @ b.T as one MXU dot_general (no materialized transpose)."""
    return lax.dot_general(a, b, (((1,), (1,)), ((), ())),
                           preferred_element_type=jnp.float32)


# ----------------------------- fused Pallas kernel ---------------------------

def psf_mlp_kernel(h_ref, a_ref, w0_ref, b0_ref, w1_ref, b1_ref, w2_ref, b2_ref,
                   basis_ref, gr_ref, gi_ref, gs_ref,
                   coe_ref, wf_ref, psf_ref):
    """One pass: coefficients -> wavefront -> PSF (global-max normalized)."""
    bs = h_ref.shape[0]
    ns = basis_ref.shape[0]          # num_seidel (= 9)
    nc = a_ref.shape[1]              # 9 coefficients (6 + 3)

    # ---- coefficient MLPs (fc1_1 ⊕ fc2_1 as one block-diagonal MLP) ---------
    # coe = (fc*_0(ones) + fc*_1(H)) * H ; fc*_0(ones) precomputed as a_ref row.
    h9 = jnp.broadcast_to(h_ref[...], (bs, nc))                       # H.repeat
    z = _leaky_relu(jnp.dot(h9, w0_ref[...],
                            preferred_element_type=jnp.float32) + b0_ref[...])
    z = _leaky_relu(jnp.dot(z, w1_ref[...],
                            preferred_element_type=jnp.float32) + b1_ref[...])
    bd = jnp.dot(z, w2_ref[...], preferred_element_type=jnp.float32) + b2_ref[...]
    coe = (a_ref[...] + bd) * h9
    coe_ref[...] = coe

    gr = gr_ref[...]
    gi = gi_ref[...]
    gs = gs_ref[...]                 # gr + gi (precomputed host-side)

    # ---- per-sample wavefront + |DFT|^2 (unnormalized) ----------------------
    for b in range(bs):                                   # bs is small & static
        cb = coe[b:b + 1, :]                              # (1, ns)
        # seidel2wavefront: pupil mask already folded into basis planes.
        wf = cb[:, 0:1] * basis_ref[0]                    # (M, M)
        for i in range(1, ns):
            wf = wf + cb[:, i:i + 1] * basis_ref[i]
        wf_ref[b] = wf

        # wavefront2psf: phase = exp(-i*2*pi*W), phase==1 -> 0
        ang = (2.0 * jnp.pi) * wf
        pr = jnp.cos(ang)
        pim = -jnp.sin(ang)
        is_one = (pr == 1.0) & (pim == 0.0)
        pr = jnp.where(is_one, 0.0, pr)
        pim = jnp.where(is_one, 0.0, pim)
        ps = pr + pim

        # Z = G @ P   (complex, 3-mult Karatsuba)
        t1 = jnp.dot(gr, pr, preferred_element_type=jnp.float32)
        t2 = jnp.dot(gi, pim, preferred_element_type=jnp.float32)
        t3 = jnp.dot(gs, ps, preferred_element_type=jnp.float32)
        zr = t1 - t2
        zi = t3 - t1 - t2
        zs = zr + zi

        # Y = Z @ G^T (complex, 3-mult Karatsuba, NT matmuls)
        s1 = _dot_nt(zr, gr)
        s2 = _dot_nt(zi, gi)
        s3 = _dot_nt(zs, gs)
        yr = s1 - s2
        yi = s3 - s1 - s2

        psf_ref[b] = yr * yr + yi * yi                    # |FFT|^2 (shift+crop in G)

    # ---- global-max normalization (matches torch: AP / torch.max(AP)) -------
    ap = psf_ref[...]
    mx = jnp.max(ap, axis=(0, 1, 2), keepdims=True)
    psf_ref[...] = ap * pl.reciprocal(mx, approx=True)


# ------------------------------ Wrapper / glue -------------------------------

class ImagingSystem:
    def __init__(self, wf_res, seidel_basis):
        self.wf_res = wf_res                    # per-color wavefront resolution M
        self.seidel_basis = seidel_basis        # per-color basis (M, M, num_seidel)


def init_params(key):
    """(in,out)-layout weights + (1,out) biases for fc1_0, fc1_1, fc2_0, fc2_1."""
    layer_dims = [
        (6, 10), (10, 10), (10, 6),             # fc1_0
        (6, 70), (70, 100), (100, 6),           # fc1_1
        (3, 70), (70, 100), (100, 3),           # fc2_0
        (3, 70), (70, 100), (100, 3),           # fc2_1
    ]
    params = []
    for fan_in, fan_out in layer_dims:
        key, kw, kb = jax.random.split(key, 3)
        w = jax.random.normal(kw, (fan_in, fan_out), jnp.float32) * np.sqrt(2.0 / fan_in)
        bound = 1.0 / np.sqrt(fan_in)
        b = jax.random.uniform(kb, (1, fan_out), jnp.float32, -bound, bound)
        params += [w, b]
    return params


@functools.partial(jax.jit, static_argnames=("M",))
def _forward_impl(params, H, basis, *, M):
    p = params
    BS = H.shape[0]

    # Batch-invariant heads fc1_0(con1), fc2_0(con2) hoisted out of the kernel.
    a1 = _mlp3(jnp.ones((1, 6), jnp.float32), *p[0:6])        # fc1_0(ones)
    a2 = _mlp3(jnp.ones((1, 3), jnp.float32), *p[12:18])      # fc2_0(ones)
    a_row = jnp.concatenate([a1, a2], axis=1)                 # (1, 9)

    # Block-diagonal packing of fc1_1 ⊕ fc2_1 -> 3 weight slabs + 3 bias rows.
    w10, b10, w11, b11, w12, b12 = p[6:12]                    # fc1_1
    w20, b20, w21, b21, w22, b22 = p[18:24]                   # fc2_1
    w0 = jnp.zeros((9, 140), jnp.float32).at[:6, :70].set(w10).at[6:, 70:].set(w20)
    b0 = jnp.concatenate([b10, b20], axis=1)                  # (1, 140)
    w1 = jnp.zeros((140, 200), jnp.float32).at[:70, :100].set(w11).at[70:, 100:].set(w21)
    b1 = jnp.concatenate([b11, b21], axis=1)                  # (1, 200)
    w2 = jnp.zeros((200, 9), jnp.float32).at[:100, :6].set(w12).at[100:, 6:].set(w22)
    b2 = jnp.concatenate([b12, b22], axis=1)                  # (1, 9)

    # Pupil (rho >= 1) mask folded into the basis planes at trace time.
    xs = np.linspace(-1.0, 1.0, M)
    Yg, Xg = np.meshgrid(xs, xs, indexing='ij')
    pupil = (np.abs(np.sqrt(Xg ** 2 + Yg ** 2)) < 1.0).astype(np.float32)
    basis3 = jnp.transpose(basis, (2, 0, 1)) * jnp.asarray(pupil)[None]   # (9, M, M)

    # DFT matrices with ZeroPad2d(2M) + fft2 + fftshift + CenterCrop(M) folded in.
    N = 5 * M
    yy = np.arange(M) - M // 2
    jj = 2 * M + np.arange(M)
    theta = 2.0 * np.pi * np.outer(yy, jj) / float(N)
    gr = jnp.asarray(np.cos(theta), jnp.float32)
    gi = jnp.asarray(-np.sin(theta), jnp.float32)
    gs = gr + gi

    vmem = pl.BlockSpec(memory_space=pltpu.MemorySpace.VMEM)
    coe, wavefront, psf = pl.pallas_call(
        psf_mlp_kernel,
        out_shape=(jax.ShapeDtypeStruct((BS, 9), jnp.float32),
                   jax.ShapeDtypeStruct((BS, M, M), jnp.float32),
                   jax.ShapeDtypeStruct((BS, M, M), jnp.float32)),
        in_specs=[vmem] * 12,
        out_specs=(vmem, vmem, vmem),
    )(H, a_row, w0, b0, w1, b1, w2, b2, basis3, gr, gi, gs)
    return coe, wavefront, psf


def psf_mlp_forward(params, IS, H, color):
    """JAX/Pallas equivalent of PSF_mlp.forward(IS, H, color) -> (coe, wavefront, psf)."""
    H = jnp.asarray(H, jnp.float32)
    if H.ndim == 0:
        H = H.reshape(1, 1)
    elif H.ndim == 1:
        H = H[:, None]
    M = int(IS.wf_res[color])
    basis = jnp.asarray(IS.seidel_basis[color], jnp.float32)    # (M, M, num_seidel)
    assert basis.shape[-1] == 9, "PSF_mlp emits 6 + 3 = 9 Seidel coefficients"
    return _forward_impl(tuple(params), H, basis, M=M)


# ------------------------------ numpy reference ------------------------------

def _ref_mlp(x, w0, b0, w1, b1, w2, b2):
    lrelu = lambda v: np.where(v >= 0, v, NEG_SLOPE * v)
    h = lrelu(x @ w0 + b0)
    h = lrelu(h @ w1 + b1)
    return h @ w2 + b2


def _ref_coe(params, H):
    p = [np.asarray(t) for t in params]
    H = np.asarray(H, np.float32).reshape(-1, 1)
    BS = H.shape[0]
    con1 = np.ones((BS, 6), np.float32)
    con2 = np.ones((BS, 3), np.float32)
    H1 = np.repeat(H, 6, axis=1)
    H2 = np.repeat(H, 3, axis=1)
    coe1 = _ref_mlp(con1, *p[0:6]) * H1 + _ref_mlp(H1, *p[6:12]) * H1
    coe2 = _ref_mlp(con2, *p[12:18]) * H2 + _ref_mlp(H2, *p[18:24]) * H2
    return np.concatenate([coe1, coe2], axis=1)


def _ref_wavefront(coe, basis):
    coe = np.asarray(coe)
    basis = np.asarray(basis)
    M = basis.shape[0]
    wf = np.einsum('bi,yxi->byx', coe, basis)
    x = np.linspace(-1, 1, M)
    Y, X = np.meshgrid(x, x, indexing='ij')
    rho = np.abs(np.sqrt(X ** 2 + Y ** 2))
    return np.where(rho[None] >= 1, 0.0, wf).astype(np.float32)


def _ref_psf(wf):
    wf = np.asarray(wf, np.float32)
    BS, M, _ = wf.shape
    N = 5 * M
    W = np.zeros((BS, N, N), np.float32)
    W[:, 2 * M:3 * M, 2 * M:3 * M] = wf          # ZeroPad2d(2*M)
    ang = (2.0 * np.pi * W).astype(np.float32)
    phase = (np.cos(ang) - 1j * np.sin(ang)).astype(np.complex64)
    phase = np.where(phase == 1, 0, phase)
    Y = np.fft.fftshift(np.fft.fft2(phase), axes=(-2, -1))
    AP = np.abs(Y) ** 2
    AP = AP[:, 2 * M:3 * M, 2 * M:3 * M]         # CenterCrop(M)
    return (AP / AP.max()).astype(np.float32)


# ------------------------------------ main ------------------------------------

if __name__ == "__main__":
    key = jax.random.PRNGKey(0)
    kp, kb, kh = jax.random.split(key, 3)

    M = 16           # wavefront resolution for this color
    BS = 2           # batch of field heights
    NUM_SEIDEL = 9   # 6 + 3 coefficients, matching the MLP outputs
    color = 0

    params = init_params(kp)
    basis = 0.05 * jax.random.normal(kb, (M, M, NUM_SEIDEL), jnp.float32)
    IS = ImagingSystem(wf_res=[M], seidel_basis=[basis])
    H = jax.random.uniform(kh, (BS,), jnp.float32)   # normalized field heights

    coe, wavefront, psf = psf_mlp_forward(params, IS, H, color)
    jax.block_until_ready((coe, wavefront, psf))

    assert coe.shape == (BS, NUM_SEIDEL) and coe.dtype == jnp.float32
    assert wavefront.shape == (BS, M, M) and wavefront.dtype == jnp.float32
    assert psf.shape == (BS, M, M) and psf.dtype == jnp.float32

    # Numerical cross-checks against a plain numpy reference of the torch forward.
    np.testing.assert_allclose(np.asarray(coe), _ref_coe(params, H),
                               rtol=3e-2, atol=1e-2)
    np.testing.assert_allclose(np.asarray(wavefront), _ref_wavefront(coe, basis),
                               rtol=3e-2, atol=5e-3)
    np.testing.assert_allclose(np.asarray(psf), _ref_psf(wavefront),
                               rtol=5e-2, atol=1e-2)

    print("KERNEL_OK")
</pallas_src>

<mosaic_0001>
module attributes {stable_mosaic.version = 11 : i64} {
  func.func @psf_mlp_kernel(%arg0: memref<2x1xf32, #tpu.memory_space<vmem>>, %arg1: memref<1x9xf32, #tpu.memory_space<vmem>>, %arg2: memref<9x140xf32, #tpu.memory_space<vmem>>, %arg3: memref<1x140xf32, #tpu.memory_space<vmem>>, %arg4: memref<140x200xf32, #tpu.memory_space<vmem>>, %arg5: memref<1x200xf32, #tpu.memory_space<vmem>>, %arg6: memref<200x9xf32, #tpu.memory_space<vmem>>, %arg7: memref<1x9xf32, #tpu.memory_space<vmem>>, %arg8: memref<9x16x16xf32, #tpu.memory_space<vmem>>, %arg9: memref<16x16xf32, #tpu.memory_space<vmem>>, %arg10: memref<16x16xf32, #tpu.memory_space<vmem>>, %arg11: memref<16x16xf32, #tpu.memory_space<vmem>>, %arg12: memref<2x9xf32, #tpu.memory_space<vmem>>, %arg13: memref<2x16x16xf32, #tpu.memory_space<vmem>>, %arg14: memref<2x16x16xf32, #tpu.memory_space<vmem>>) attributes {dimension_semantics = [], scalar_prefetch = 0 : i64, scratch_operands = 0 : i64, tpu.core_type = #tpu.core_type<tc>} {
    %c0 = arith.constant 0 : index
    %c0_0 = arith.constant 0 : index
    %0 = vector.load %arg0[%c0, %c0_0] : memref<2x1xf32, #tpu.memory_space<vmem>>, vector<2x1xf32>
    %1 = vector.shape_cast %0 : vector<2x1xf32> to vector<2x1xf32>
    %2 = vector.broadcast %1 : vector<2x1xf32> to vector<2x9xf32>
    %c0_1 = arith.constant 0 : index
    %c0_2 = arith.constant 0 : index
    %3 = vector.load %arg2[%c0_1, %c0_2] : memref<9x140xf32, #tpu.memory_space<vmem>>, vector<9x140xf32>
    %cst = arith.constant dense<0.000000e+00> : vector<2x140xf32>
    %4 = tpu.matmul %2, %3, %cst {dimension_numbers = #tpu.dot_dimension_numbers<[1], [0], [0], [1], [0, 0, 1, 1], [], []>} : vector<2x9xf32>, vector<9x140xf32>, vector<2x140xf32> -> vector<2x140xf32>
    %c0_3 = arith.constant 0 : index
    %c0_4 = arith.constant 0 : index
    %5 = vector.load %arg3[%c0_3, %c0_4] : memref<1x140xf32, #tpu.memory_space<vmem>>, vector<1x140xf32>
    %6 = vector.broadcast %5 : vector<1x140xf32> to vector<2x140xf32>
    %7 = arith.addf %4, %6 : vector<2x140xf32>
    %cst_5 = arith.constant 0.000000e+00 : f32
    %8 = vector.broadcast %cst_5 : f32 to vector<2x140xf32>
    %9 = arith.cmpf oge, %7, %8 : vector<2x140xf32>
    %cst_6 = arith.constant 2.000000e-02 : f32
    %10 = vector.broadcast %cst_6 : f32 to vector<2x140xf32>
    %11 = arith.mulf %10, %7 : vector<2x140xf32>
    %12 = arith.select %9, %7, %11 : vector<2x140xi1>, vector<2x140xf32>
    %c0_7 = arith.constant 0 : index
    %c0_8 = arith.constant 0 : index
    %13 = vector.load %arg4[%c0_7, %c0_8] : memref<140x200xf32, #tpu.memory_space<vmem>>, vector<140x200xf32>
    %cst_9 = arith.constant dense<0.000000e+00> : vector<2x200xf32>
    %14 = tpu.matmul %12, %13, %cst_9 {dimension_numbers = #tpu.dot_dimension_numbers<[1], [0], [0], [1], [0, 0, 1, 1], [], []>} : vector<2x140xf32>, vector<140x200xf32>, vector<2x200xf32> -> vector<2x200xf32>
    %c0_10 = arith.constant 0 : index
    %c0_11 = arith.constant 0 : index
    %15 = vector.load %arg5[%c0_10, %c0_11] : memref<1x200xf32, #tpu.memory_space<vmem>>, vector<1x200xf32>
    %16 = vector.broadcast %15 : vector<1x200xf32> to vector<2x200xf32>
    %17 = arith.addf %14, %16 : vector<2x200xf32>
    %cst_12 = arith.constant 0.000000e+00 : f32
    %18 = vector.broadcast %cst_12 : f32 to vector<2x200xf32>
    %19 = arith.cmpf oge, %17, %18 : vector<2x200xf32>
    %cst_13 = arith.constant 2.000000e-02 : f32
    %20 = vector.broadcast %cst_13 : f32 to vector<2x200xf32>
    %21 = arith.mulf %20, %17 : vector<2x200xf32>
    %22 = arith.select %19, %17, %21 : vector<2x200xi1>, vector<2x200xf32>
    %c0_14 = arith.constant 0 : index
    %c0_15 = arith.constant 0 : index
    %23 = vector.load %arg6[%c0_14, %c0_15] : memref<200x9xf32, #tpu.memory_space<vmem>>, vector<200x9xf32>
    %cst_16 = arith.constant dense<0.000000e+00> : vector<2x9xf32>
    %24 = tpu.matmul %22, %23, %cst_16 {dimension_numbers = #tpu.dot_dimension_numbers<[1], [0], [0], [1], [0, 0, 1, 1], [], []>} : vector<2x200xf32>, vector<200x9xf32>, vector<2x9xf32> -> vector<2x9xf32>
    %c0_17 = arith.constant 0 : index
    %c0_18 = arith.constant 0 : index
    %25 = vector.load %arg7[%c0_17, %c0_18] : memref<1x9xf32, #tpu.memory_space<vmem>>, vector<1x9xf32>
    %26 = vector.broadcast %25 : vector<1x9xf32> to vector<2x9xf32>
    %27 = arith.addf %24, %26 : vector<2x9xf32>
    %c0_19 = arith.constant 0 : index
    %c0_20 = arith.constant 0 : index
    %28 = vector.load %arg1[%c0_19, %c0_20] : memref<1x9xf32, #tpu.memory_space<vmem>>, vector<1x9xf32>
    %29 = vector.broadcast %28 : vector<1x9xf32> to vector<2x9xf32>
    %30 = arith.addf %29, %27 : vector<2x9xf32>
    %31 = arith.mulf %30, %2 : vector<2x9xf32>
    %c0_21 = arith.constant 0 : index
    %c0_22 = arith.constant 0 : index
    %32 = vector.load %arg12[%c0_21, %c0_22] : memref<2x9xf32, #tpu.memory_space<vmem>>, vector<2x9xf32>
    tpu.vector_store %arg12[%c0_21, %c0_22], %31 {strides = array<i32>} : memref<2x9xf32, #tpu.memory_space<vmem>>, vector<2x9xf32>,
    %c0_23 = arith.constant 0 : index
    %c0_24 = arith.constant 0 : index
    %33 = vector.load %arg9[%c0_23, %c0_24] : memref<16x16xf32, #tpu.memory_space<vmem>>, vector<16x16xf32>
    %c0_25 = arith.constant 0 : index
    %c0_26 = arith.constant 0 : index
    %34 = vector.load %arg10[%c0_25, %c0_26] : memref<16x16xf32, #tpu.memory_space<vmem>>, vector<16x16xf32>
    %c0_27 = arith.constant 0 : index
    %c0_28 = arith.constant 0 : index
    %35 = vector.load %arg11[%c0_27, %c0_28] : memref<16x16xf32, #tpu.memory_space<vmem>>, vector<16x16xf32>
    %36 = vector.extract_strided_slice %31 {offsets = [0, 0], sizes = [1, 9], strides = [1, 1]} : vector<2x9xf32> to vector<1x9xf32>
    %37 = vector.extract_strided_slice %36 {offsets = [0, 0], sizes = [1, 1], strides = [1, 1]} : vector<1x9xf32> to vector<1x1xf32>
    %c0_29 = arith.constant 0 : index
    %c0_30 = arith.constant 0 : index
    %c0_31 = arith.constant 0 : index
    %38 = vector.load %arg8[%c0_29, %c0_30, %c0_31] : memref<9x16x16xf32, #tpu.memory_space<vmem>>, vector<1x16x16xf32>
    %39 = vector.shape_cast %38 : vector<1x16x16xf32> to vector<16x16xf32>
    %40 = vector.broadcast %37 : vector<1x1xf32> to vector<16x16xf32>
    %41 = arith.mulf %40, %39 : vector<16x16xf32>
    %42 = vector.extract_strided_slice %36 {offsets = [0, 1], sizes = [1, 1], strides = [1, 1]} : vector<1x9xf32> to vector<1x1xf32>
    %c1 = arith.constant 1 : index
    %c0_32 = arith.constant 0 : index
    %c0_33 = arith.constant 0 : index
    %43 = vector.load %arg8[%c1, %c0_32, %c0_33] : memref<9x16x16xf32, #tpu.memory_space<vmem>>, vector<1x16x16xf32>
    %44 = vector.shape_cast %43 : vector<1x16x16xf32> to vector<16x16xf32>
    %45 = vector.broadcast %42 : vector<1x1xf32> to vector<16x16xf32>
    %46 = arith.mulf %45, %44 : vector<16x16xf32>
    %47 = arith.addf %41, %46 : vector<16x16xf32>
    %48 = vector.extract_strided_slice %36 {offsets = [0, 2], sizes = [1, 1], strides = [1, 1]} : vector<1x9xf32> to vector<1x1xf32>
    %c2 = arith.constant 2 : index
    %c0_34 = arith.constant 0 : index
    %c0_35 = arith.constant 0 : index
    %49 = vector.load %arg8[%c2, %c0_34, %c0_35] : memref<9x16x16xf32, #tpu.memory_space<vmem>>, vector<1x16x16xf32>
    %50 = vector.shape_cast %49 : vector<1x16x16xf32> to vector<16x16xf32>
    %51 = vector.broadcast %48 : vector<1x1xf32> to vector<16x16xf32>
    %52 = arith.mulf %51, %50 : vector<16x16xf32>
    %53 = arith.addf %47, %52 : vector<16x16xf32>
    %54 = vector.extract_strided_slice %36 {offsets = [0, 3], sizes = [1, 1], strides = [1, 1]} : vector<1x9xf32> to vector<1x1xf32>
    %c3 = arith.constant 3 : index
    %c0_36 = arith.constant 0 : index
    %c0_37 = arith.constant 0 : index
    %55 = vector.load %arg8[%c3, %c0_36, %c0_37] : memref<9x16x16xf32, #tpu.memory_space<vmem>>, vector<1x16x16xf32>
    %56 = vector.shape_cast %55 : vector<1x16x16xf32> to vector<16x16xf32>
    %57 = vector.broadcast %54 : vector<1x1xf32> to vector<16x16xf32>
    %58 = arith.mulf %57, %56 : vector<16x16xf32>
    %59 = arith.addf %53, %58 : vector<16x16xf32>
    %60 = vector.extract_strided_slice %36 {offsets = [0, 4], sizes = [1, 1], strides = [1, 1]} : vector<1x9xf32> to vector<1x1xf32>
    %c4 = arith.constant 4 : index
    %c0_38 = arith.constant 0 : index
    %c0_39 = arith.constant 0 : index
    %61 = vector.load %arg8[%c4, %c0_38, %c0_39] : memref<9x16x16xf32, #tpu.memory_space<vmem>>, vector<1x16x16xf32>
    %62 = vector.shape_cast %61 : vector<1x16x16xf32> to vector<16x16xf32>
    %63 = vector.broadcast %60 : vector<1x1xf32> to vector<16x16xf32>
    %64 = arith.mulf %63, %62 : vector<16x16xf32>
    %65 = arith.addf %59, %64 : vector<16x16xf32>
    %66 = vector.extract_strided_slice %36 {offsets = [0, 5], sizes = [1, 1], strides = [1, 1]} : vector<1x9xf32> to vector<1x1xf32>
    %c5 = arith.constant 5 : index
    %c0_40 = arith.constant 0 : index
    %c0_41 = arith.constant 0 : index
    %67 = vector.load %arg8[%c5, %c0_40, %c0_41] : memref<9x16x16xf32, #tpu.memory_space<vmem>>, vector<1x16x16xf32>
    %68 = vector.shape_cast %67 : vector<1x16x16xf32> to vector<16x16xf32>
    %69 = vector.broadcast %66 : vector<1x1xf32> to vector<16x16xf32>
    %70 = arith.mulf %69, %68 : vector<16x16xf32>
    %71 = arith.addf %65, %70 : vector<16x16xf32>
    %72 = vector.extract_strided_slice %36 {offsets = [0, 6], sizes = [1, 1], strides = [1, 1]} : vector<1x9xf32> to vector<1x1xf32>
    %c6 = arith.constant 6 : index
    %c0_42 = arith.constant 0 : index
    %c0_43 = arith.constant 0 : index
    %73 = vector.load %arg8[%c6, %c0_42, %c0_43] : memref<9x16x16xf32, #tpu.memory_space<vmem>>, vector<1x16x16xf32>
    %74 = vector.shape_cast %73 : vector<1x16x16xf32> to vector<16x16xf32>
    %75 = vector.broadcast %72 : vector<1x1xf32> to vector<16x16xf32>
    %76 = arith.mulf %75, %74 : vector<16x16xf32>
    %77 = arith.addf %71, %76 : vector<16x16xf32>
    %78 = vector.extract_strided_slice %36 {offsets = [0, 7], sizes = [1, 1], strides = [1, 1]} : vector<1x9xf32> to vector<1x1xf32>
    %c7 = arith.constant 7 : index
    %c0_44 = arith.constant 0 : index
    %c0_45 = arith.constant 0 : index
    %79 = vector.load %arg8[%c7, %c0_44, %c0_45] : memref<9x16x16xf32, #tpu.memory_space<vmem>>, vector<1x16x16xf32>
    %80 = vector.shape_cast %79 : vector<1x16x16xf32> to vector<16x16xf32>
    %81 = vector.broadcast %78 : vector<1x1xf32> to vector<16x16xf32>
    %82 = arith.mulf %81, %80 : vector<16x16xf32>
    %83 = arith.addf %77, %82 : vector<16x16xf32>
    %84 = vector.extract_strided_slice %36 {offsets = [0, 8], sizes = [1, 1], strides = [1, 1]} : vector<1x9xf32> to vector<1x1xf32>
    %c8 = arith.constant 8 : index
    %c0_46 = arith.constant 0 : index
    %c0_47 = arith.constant 0 : index
    %85 = vector.load %arg8[%c8, %c0_46, %c0_47] : memref<9x16x16xf32, #tpu.memory_space<vmem>>, vector<1x16x16xf32>
    %86 = vector.shape_cast %85 : vector<1x16x16xf32> to vector<16x16xf32>
    %87 = vector.broadcast %84 : vector<1x1xf32> to vector<16x16xf32>
    %88 = arith.mulf %87, %86 : vector<16x16xf32>
    %89 = arith.addf %83, %88 : vector<16x16xf32>
    %c0_48 = arith.constant 0 : index
    %c0_49 = arith.constant 0 : index
    %c0_50 = arith.constant 0 : index
    %90 = vector.load %arg13[%c0_48, %c0_49, %c0_50] : memref<2x16x16xf32, #tpu.memory_space<vmem>>, vector<1x16x16xf32>
    %91 = vector.shape_cast %90 : vector<1x16x16xf32> to vector<16x16xf32>
    %92 = vector.shape_cast %89 : vector<16x16xf32> to vector<1x16x16xf32>
    tpu.vector_store %arg13[%c0_48, %c0_49, %c0_50], %92 {strides = array<i32>} : memref<2x16x16xf32, #tpu.memory_space<vmem>>, vector<1x16x16xf32>,
    %cst_51 = arith.constant 6.28318548 : f32
    %93 = vector.broadcast %cst_51 : f32 to vector<16x16xf32>
    %94 = arith.mulf %93, %89 : vector<16x16xf32>
    %95 = math.cos %94 : vector<16x16xf32>
    %96 = math.sin %94 : vector<16x16xf32>
    %cst_52 = arith.constant 0.000000e+00 : f32
    %97 = vector.broadcast %cst_52 : f32 to vector<16x16xf32>
    %98 = arith.subf %97, %96 : vector<16x16xf32>
    %cst_53 = arith.constant 1.000000e+00 : f32
    %99 = vector.broadcast %cst_53 : f32 to vector<16x16xf32>
    %100 = arith.cmpf oeq, %95, %99 : vector<16x16xf32>
    %cst_54 = arith.constant 0.000000e+00 : f32
    %101 = vector.broadcast %cst_54 : f32 to vector<16x16xf32>
    %102 = arith.cmpf oeq, %98, %101 : vector<16x16xf32>
    %103 = arith.andi %100, %102 : vector<16x16xi1>
    %cst_55 = arith.constant 0.000000e+00 : f32
    %104 = vector.broadcast %cst_55 : f32 to vector<16x16xf32>
    %105 = arith.select %103, %104, %95 : vector<16x16xi1>, vector<16x16xf32>
    %cst_56 = arith.constant 0.000000e+00 : f32
    %106 = vector.broadcast %cst_56 : f32 to vector<16x16xf32>
    %107 = arith.select %103, %106, %98 : vector<16x16xi1>, vector<16x16xf32>
    %108 = arith.addf %105, %107 : vector<16x16xf32>
    %cst_57 = arith.constant dense<0.000000e+00> : vector<16x16xf32>
    %109 = tpu.matmul %33, %105, %cst_57 {dimension_numbers = #tpu.dot_dimension_numbers<[1], [0], [0], [1], [0, 0, 1, 1], [], []>} : vector<16x16xf32>, vector<16x16xf32>, vector<16x16xf32> -> vector<16x16xf32>
    %cst_58 = arith.constant dense<0.000000e+00> : vector<16x16xf32>
    %110 = tpu.matmul %34, %107, %cst_58 {dimension_numbers = #tpu.dot_dimension_numbers<[1], [0], [0], [1], [0, 0, 1, 1], [], []>} : vector<16x16xf32>, vector<16x16xf32>, vector<16x16xf32> -> vector<16x16xf32>
    %cst_59 = arith.constant dense<0.000000e+00> : vector<16x16xf32>
    %111 = tpu.matmul %35, %108, %cst_59 {dimension_numbers = #tpu.dot_dimension_numbers<[1], [0], [0], [1], [0, 0, 1, 1], [], []>} : vector<16x16xf32>, vector<16x16xf32>, vector<16x16xf32> -> vector<16x16xf32>
    %112 = arith.subf %109, %110 : vector<16x16xf32>
    %113 = arith.subf %111, %109 : vector<16x16xf32>
    %114 = arith.subf %113, %110 : vector<16x16xf32>
    %115 = arith.addf %112, %114 : vector<16x16xf32>
    %cst_60 = arith.constant dense<0.000000e+00> : vector<16x16xf32>
    %116 = tpu.matmul %112, %33, %cst_60 {dimension_numbers = #tpu.dot_dimension_numbers<[1], [1], [0], [0], [0, 0, 1, 0], [], []>} : vector<16x16xf32>, vector<16x16xf32>, vector<16x16xf32> -> vector<16x16xf32>
    %cst_61 = arith.constant dense<0.000000e+00> : vector<16x16xf32>
    %117 = tpu.matmul %114, %34, %cst_61 {dimension_numbers = #tpu.dot_dimension_numbers<[1], [1], [0], [0], [0, 0, 1, 0], [], []>} : vector<16x16xf32>, vector<16x16xf32>, vector<16x16xf32> -> vector<16x16xf32>
    %cst_62 = arith.constant dense<0.000000e+00> : vector<16x16xf32>
    %118 = tpu.matmul %115, %35, %cst_62 {dimension_numbers = #tpu.dot_dimension_numbers<[1], [1], [0], [0], [0, 0, 1, 0], [], []>} : vector<16x16xf32>, vector<16x16xf32>, vector<16x16xf32> -> vector<16x16xf32>
    %119 = arith.subf %116, %117 : vector<16x16xf32>
    %120 = arith.subf %118, %116 : vector<16x16xf32>
    %121 = arith.subf %120, %117 : vector<16x16xf32>
    %122 = arith.mulf %119, %119 : vector<16x16xf32>
    %123 = arith.mulf %121, %121 : vector<16x16xf32>
    %124 = arith.addf %122, %123 : vector<16x16xf32>
    %c0_63 = arith.constant 0 : index
    %c0_64 = arith.constant 0 : index
    %c0_65 = arith.constant 0 : index
    %125 = vector.load %arg14[%c0_63, %c0_64, %c0_65] : memref<2x16x16xf32, #tpu.memory_space<vmem>>, vector<1x16x16xf32>
    %126 = vector.shape_cast %125 : vector<1x16x16xf32> to vector<16x16xf32>
    %127 = vector.shape_cast %124 : vector<16x16xf32> to vector<1x16x16xf32>
    tpu.vector_store %arg14[%c0_63, %c0_64, %c0_65], %127 {strides = array<i32>} : memref<2x16x16xf32, #tpu.memory_space<vmem>>, vector<1x16x16xf32>,
    %128 = vector.extract_strided_slice %31 {offsets = [1, 0], sizes = [1, 9], strides = [1, 1]} : vector<2x9xf32> to vector<1x9xf32>
    %129 = vector.extract_strided_slice %128 {offsets = [0, 0], sizes = [1, 1], strides = [1, 1]} : vector<1x9xf32> to vector<1x1xf32>
    %c0_66 = arith.constant 0 : index
    %c0_67 = arith.constant 0 : index
    %c0_68 = arith.constant 0 : index
    %130 = vector.load %arg8[%c0_66, %c0_67, %c0_68] : memref<9x16x16xf32, #tpu.memory_space<vmem>>, vector<1x16x16xf32>
    %131 = vector.shape_cast %130 : vector<1x16x16xf32> to vector<16x16xf32>
    %132 = vector.broadcast %129 : vector<1x1xf32> to vector<16x16xf32>
    %133 = arith.mulf %132, %131 : vector<16x16xf32>
    %134 = vector.extract_strided_slice %128 {offsets = [0, 1], sizes = [1, 1], strides = [1, 1]} : vector<1x9xf32> to vector<1x1xf32>
    %c1_69 = arith.constant 1 : index
    %c0_70 = arith.constant 0 : index
    %c0_71 = arith.constant 0 : index
    %135 = vector.load %arg8[%c1_69, %c0_70, %c0_71] : memref<9x16x16xf32, #tpu.memory_space<vmem>>, vector<1x16x16xf32>
    %136 = vector.shape_cast %135 : vector<1x16x16xf32> to vector<16x16xf32>
    %137 = vector.broadcast %134 : vector<1x1xf32> to vector<16x16xf32>
    %138 = arith.mulf %137, %136 : vector<16x16xf32>
    %139 = arith.addf %133, %138 : vector<16x16xf32>
    %140 = vector.extract_strided_slice %128 {offsets = [0, 2], sizes = [1, 1], strides = [1, 1]} : vector<1x9xf32> to vector<1x1xf32>
    %c2_72 = arith.constant 2 : index
    %c0_73 = arith.constant 0 : index
    %c0_74 = arith.constant 0 : index
    %141 = vector.load %arg8[%c2_72, %c0_73, %c0_74] : memref<9x16x16xf32, #tpu.memory_space<vmem>>, vector<1x16x16xf32>
    %142 = vector.shape_cast %141 : vector<1x16x16xf32> to vector<16x16xf32>
    %143 = vector.broadcast %140 : vector<1x1xf32> to vector<16x16xf32>
    %144 = arith.mulf %143, %142 : vector<16x16xf32>
    %145 = arith.addf %139, %144 : vector<16x16xf32>
    %146 = vector.extract_strided_slice %128 {offsets = [0, 3], sizes = [1, 1], strides = [1, 1]} : vector<1x9xf32> to vector<1x1xf32>
    %c3_75 = arith.constant 3 : index
    %c0_76 = arith.constant 0 : index
    %c0_77 = arith.constant 0 : index
    %147 = vector.load %arg8[%c3_75, %c0_76, %c0_77] : memref<9x16x16xf32, #tpu.memory_space<vmem>>, vector<1x16x16xf32>
    %148 = vector.shape_cast %147 : vector<1x16x16xf32> to vector<16x16xf32>
    %149 = vector.broadcast %146 : vector<1x1xf32> to vector<16x16xf32>
    %150 = arith.mulf %149, %148 : vector<16x16xf32>
    %151 = arith.addf %145, %150 : vector<16x16xf32>
    %152 = vector.extract_strided_slice %128 {offsets = [0, 4], sizes = [1, 1], strides = [1, 1]} : vector<1x9xf32> to vector<1x1xf32>
    %c4_78 = arith.constant 4 : index
    %c0_79 = arith.constant 0 : index
    %c0_80 = arith.constant 0 : index
    %153 = vector.load %arg8[%c4_78, %c0_79, %c0_80] : memref<9x16x16xf32, #tpu.memory_space<vmem>>, vector<1x16x16xf32>
    %154 = vector.shape_cast %153 : vector<1x16x16xf32> to vector<16x16xf32>
    %155 = vector.broadcast %152 : vector<1x1xf32> to vector<16x16xf32>
    %156 = arith.mulf %155, %154 : vector<16x16xf32>
    %157 = arith.addf %151, %156 : vector<16x16xf32>
    %158 = vector.extract_strided_slice %128 {offsets = [0, 5], sizes = [1, 1], strides = [1, 1]} : vector<1x9xf32> to vector<1x1xf32>
    %c5_81 = arith.constant 5 : index
    %c0_82 = arith.constant 0 : index
    %c0_83 = arith.constant 0 : index
    %159 = vector.load %arg8[%c5_81, %c0_82, %c0_83] : memref<9x16x16xf32, #tpu.memory_space<vmem>>, vector<1x16x16xf32>
    %160 = vector.shape_cast %159 : vector<1x16x16xf32> to vector<16x16xf32>
    %161 = vector.broadcast %158 : vector<1x1xf32> to vector<16x16xf32>
    %162 = arith.mulf %161, %160 : vector<16x16xf32>
    %163 = arith.addf %157, %162 : vector<16x16xf32>
    %164 = vector.extract_strided_slice %128 {offsets = [0, 6], sizes = [1, 1], strides = [1, 1]} : vector<1x9xf32> to vector<1x1xf32>
    %c6_84 = arith.constant 6 : index
    %c0_85 = arith.constant 0 : index
    %c0_86 = arith.constant 0 : index
    %165 = vector.load %arg8[%c6_84, %c0_85, %c0_86] : memref<9x16x16xf32, #tpu.memory_space<vmem>>, vector<1x16x16xf32>
    %166 = vector.shape_cast %165 : vector<1x16x16xf32> to vector<16x16xf32>
    %167 = vector.broadcast %164 : vector<1x1xf32> to vector<16x16xf32>
    %168 = arith.mulf %167, %166 : vector<16x16xf32>
    %169 = arith.addf %163, %168 : vector<16x16xf32>
    %170 = vector.extract_strided_slice %128 {offsets = [0, 7], sizes = [1, 1], strides = [1, 1]} : vector<1x9xf32> to vector<1x1xf32>
    %c7_87 = arith.constant 7 : index
    %c0_88 = arith.constant 0 : index
    %c0_89 = arith.constant 0 : index
    %171 = vector.load %arg8[%c7_87, %c0_88, %c0_89] : memref<9x16x16xf32, #tpu.memory_space<vmem>>, vector<1x16x16xf32>
    %172 = vector.shape_cast %171 : vector<1x16x16xf32> to vector<16x16xf32>
    %173 = vector.broadcast %170 : vector<1x1xf32> to vector<16x16xf32>
    %174 = arith.mulf %173, %172 : vector<16x16xf32>
    %175 = arith.addf %169, %174 : vector<16x16xf32>
    %176 = vector.extract_strided_slice %128 {offsets = [0, 8], sizes = [1, 1], strides = [1, 1]} : vector<1x9xf32> to vector<1x1xf32>
    %c8_90 = arith.constant 8 : index
    %c0_91 = arith.constant 0 : index
    %c0_92 = arith.constant 0 : index
    %177 = vector.load %arg8[%c8_90, %c0_91, %c0_92] : memref<9x16x16xf32, #tpu.memory_space<vmem>>, vector<1x16x16xf32>
    %178 = vector.shape_cast %177 : vector<1x16x16xf32> to vector<16x16xf32>
    %179 = vector.broadcast %176 : vector<1x1xf32> to vector<16x16xf32>
    %180 = arith.mulf %179, %178 : vector<16x16xf32>
    %181 = arith.addf %175, %180 : vector<16x16xf32>
    %c1_93 = arith.constant 1 : index
    %c0_94 = arith.constant 0 : index
    %c0_95 = arith.constant 0 : index
    %182 = vector.load %arg13[%c1_93, %c0_94, %c0_95] : memref<2x16x16xf32, #tpu.memory_space<vmem>>, vector<1x16x16xf32>
    %183 = vector.shape_cast %182 : vector<1x16x16xf32> to vector<16x16xf32>
    %184 = vector.shape_cast %181 : vector<16x16xf32> to vector<1x16x16xf32>
    tpu.vector_store %arg13[%c1_93, %c0_94, %c0_95], %184 {strides = array<i32>} : memref<2x16x16xf32, #tpu.memory_space<vmem>>, vector<1x16x16xf32>,
    %cst_96 = arith.constant 6.28318548 : f32
    %185 = vector.broadcast %cst_96 : f32 to vector<16x16xf32>
    %186 = arith.mulf %185, %181 : vector<16x16xf32>
    %187 = math.cos %186 : vector<16x16xf32>
    %188 = math.sin %186 : vector<16x16xf32>
    %cst_97 = arith.constant 0.000000e+00 : f32
    %189 = vector.broadcast %cst_97 : f32 to vector<16x16xf32>
    %190 = arith.subf %189, %188 : vector<16x16xf32>
    %cst_98 = arith.constant 1.000000e+00 : f32
    %191 = vector.broadcast %cst_98 : f32 to vector<16x16xf32>
    %192 = arith.cmpf oeq, %187, %191 : vector<16x16xf32>
    %cst_99 = arith.constant 0.000000e+00 : f32
    %193 = vector.broadcast %cst_99 : f32 to vector<16x16xf32>
    %194 = arith.cmpf oeq, %190, %193 : vector<16x16xf32>
    %195 = arith.andi %192, %194 : vector<16x16xi1>
    %cst_100 = arith.constant 0.000000e+00 : f32
    %196 = vector.broadcast %cst_100 : f32 to vector<16x16xf32>
    %197 = arith.select %195, %196, %187 : vector<16x16xi1>, vector<16x16xf32>
    %cst_101 = arith.constant 0.000000e+00 : f32
    %198 = vector.broadcast %cst_101 : f32 to vector<16x16xf32>
    %199 = arith.select %195, %198, %190 : vector<16x16xi1>, vector<16x16xf32>
    %200 = arith.addf %197, %199 : vector<16x16xf32>
    %cst_102 = arith.constant dense<0.000000e+00> : vector<16x16xf32>
    %201 = tpu.matmul %33, %197, %cst_102 {dimension_numbers = #tpu.dot_dimension_numbers<[1], [0], [0], [1], [0, 0, 1, 1], [], []>} : vector<16x16xf32>, vector<16x16xf32>, vector<16x16xf32> -> vector<16x16xf32>
    %cst_103 = arith.constant dense<0.000000e+00> : vector<16x16xf32>
    %202 = tpu.matmul %34, %199, %cst_103 {dimension_numbers = #tpu.dot_dimension_numbers<[1], [0], [0], [1], [0, 0, 1, 1], [], []>} : vector<16x16xf32>, vector<16x16xf32>, vector<16x16xf32> -> vector<16x16xf32>
    %cst_104 = arith.constant dense<0.000000e+00> : vector<16x16xf32>
    %203 = tpu.matmul %35, %200, %cst_104 {dimension_numbers = #tpu.dot_dimension_numbers<[1], [0], [0], [1], [0, 0, 1, 1], [], []>} : vector<16x16xf32>, vector<16x16xf32>, vector<16x16xf32> -> vector<16x16xf32>
    %204 = arith.subf %201, %202 : vector<16x16xf32>
    %205 = arith.subf %203, %201 : vector<16x16xf32>
    %206 = arith.subf %205, %202 : vector<16x16xf32>
    %207 = arith.addf %204, %206 : vector<16x16xf32>
    %cst_105 = arith.constant dense<0.000000e+00> : vector<16x16xf32>
    %208 = tpu.matmul %204, %33, %cst_105 {dimension_numbers = #tpu.dot_dimension_numbers<[1], [1], [0], [0], [0, 0, 1, 0], [], []>} : vector<16x16xf32>, vector<16x16xf32>, vector<16x16xf32> -> vector<16x16xf32>
    %cst_106 = arith.constant dense<0.000000e+00> : vector<16x16xf32>
    %209 = tpu.matmul %206, %34, %cst_106 {dimension_numbers = #tpu.dot_dimension_numbers<[1], [1], [0], [0], [0, 0, 1, 0], [], []>} : vector<16x16xf32>, vector<16x16xf32>, vector<16x16xf32> -> vector<16x16xf32>
    %cst_107 = arith.constant dense<0.000000e+00> : vector<16x16xf32>
    %210 = tpu.matmul %207, %35, %cst_107 {dimension_numbers = #tpu.dot_dimension_numbers<[1], [1], [0], [0], [0, 0, 1, 0], [], []>} : vector<16x16xf32>, vector<16x16xf32>, vector<16x16xf32> -> vector<16x16xf32>
    %211 = arith.subf %208, %209 : vector<16x16xf32>
    %212 = arith.subf %210, %208 : vector<16x16xf32>
    %213 = arith.subf %212, %209 : vector<16x16xf32>
    %214 = arith.mulf %211, %211 : vector<16x16xf32>
    %215 = arith.mulf %213, %213 : vector<16x16xf32>
    %216 = arith.addf %214, %215 : vector<16x16xf32>
    %c1_108 = arith.constant 1 : index
    %c0_109 = arith.constant 0 : index
    %c0_110 = arith.constant 0 : index
    %217 = vector.load %arg14[%c1_108, %c0_109, %c0_110] : memref<2x16x16xf32, #tpu.memory_space<vmem>>, vector<1x16x16xf32>
    %218 = vector.shape_cast %217 : vector<1x16x16xf32> to vector<16x16xf32>
    %219 = vector.shape_cast %216 : vector<16x16xf32> to vector<1x16x16xf32>
    tpu.vector_store %arg14[%c1_108, %c0_109, %c0_110], %219 {strides = array<i32>} : memref<2x16x16xf32, #tpu.memory_space<vmem>>, vector<1x16x16xf32>,
    %c0_111 = arith.constant 0 : index
    %c0_112 = arith.constant 0 : index
    %c0_113 = arith.constant 0 : index
    %220 = vector.load %arg14[%c0_111, %c0_112, %c0_113] : memref<2x16x16xf32, #tpu.memory_space<vmem>>, vector<2x16x16xf32>
    %221 = vector.shape_cast %220 : vector<2x16x16xf32> to vector<1x2x16x16xf32>
    %cst_114 = arith.constant dense<0xFF800000> : vector<1xf32>
    %222 = vector.multi_reduction <maximumf>, %221, %cst_114 [1, 2, 3] : vector<1x2x16x16xf32> to vector<1xf32>
    %223 = vector.shape_cast %222 : vector<1xf32> to vector<1x1x1x1xf32>
    %224 = vector.extract %223[0, 0, 0, 0] : f32 from vector<1x1x1x1xf32>
    %225 = vector.broadcast %224 : f32 to vector<1x1x1xf32>
    %226 = tpu.reciprocal %225 {approx = true} : vector<1x1x1xf32> -> vector<1x1x1xf32>
    %227 = vector.broadcast %226 : vector<1x1x1xf32> to vector<2x16x16xf32>
    %228 = arith.mulf %220, %227 : vector<2x16x16xf32>
    %c0_115 = arith.constant 0 : index
    %c0_116 = arith.constant 0 : index
    %c0_117 = arith.constant 0 : index
    %229 = vector.load %arg14[%c0_115, %c0_116, %c0_117] : memref<2x16x16xf32, #tpu.memory_space<vmem>>, vector<2x16x16xf32>
    tpu.vector_store %arg14[%c0_115, %c0_116, %c0_117], %228 {strides = array<i32>} : memref<2x16x16xf32, #tpu.memory_space<vmem>>, vector<2x16x16xf32>,
    return
  }
}

</mosaic_0001>

<llo_original>
// kernel: _forward_impl.1
$region0: #{_forward_impl.1}
  #allocation0 [shape = 'u32[]', space=smem, size = 0x4, offset = 0x4, fixed_abs, tag = 'smem constant byte address 0x4 - core index']
  #allocation1 [shape = 'u32[144,128]{1,0:T(1,128)}', space=vmem, size = 0x12000, scoped, tag = 'internal scratch']
  %s0 = inlined_call_operand.vmem [shape: f32[2,1], index: 0, kind: input, shape index: {}]
  %s1 = inlined_call_operand.vmem [shape: f32[1,9], index: 1, kind: input, shape index: {}]
  %s2 = inlined_call_operand.vmem [shape: f32[9,140], index: 2, kind: input, shape index: {}]
  %s3 = inlined_call_operand.vmem [shape: f32[1,140], index: 3, kind: input, shape index: {}]
  %s4 = inlined_call_operand.vmem [shape: f32[140,200], index: 4, kind: input, shape index: {}]
  %s5 = inlined_call_operand.vmem [shape: f32[1,200], index: 5, kind: input, shape index: {}]
  %s6 = inlined_call_operand.vmem [shape: f32[200,9], index: 6, kind: input, shape index: {}]
  %s7 = inlined_call_operand.vmem [shape: f32[1,9], index: 7, kind: input, shape index: {}]
  %s8 = inlined_call_operand.vmem [shape: f32[9,16,16], index: 8, kind: input, shape index: {}]
  %s9 = inlined_call_operand.vmem [shape: f32[16,16], index: 9, kind: input, shape index: {}]
  %s10 = inlined_call_operand.vmem [shape: f32[16,16], index: 10, kind: input, shape index: {}]
  %s11 = inlined_call_operand.vmem [shape: f32[16,16], index: 11, kind: input, shape index: {}]
  %s12 = inlined_call_operand.hbm [shape: f32[2,9], index: 12, kind: output, shape index: {0}]
  %s13 = inlined_call_operand.hbm [shape: f32[2,16,16], index: 13, kind: output, shape index: {1}]
  %s14 = inlined_call_operand.hbm [shape: f32[2,16,16], index: 14, kind: output, shape index: {2}]
  %15 = xla_tuple %s12, %s13, %s14
  %s16 = sld [smem:[#allocation0]]
  $region74: #{_forward_impl.1} parent=0
    _
  %s18 = ssub.s32 1, %s16
  %s19 = scalar_select 0, %s18, %s16
  $region1: #{_forward_impl.1} parent=0
    #allocation2 [shape = 'u8[1024]{0}', space=vmem, size = 0x400, scoped, tag = 'output window, operand 0, single buffered']
    #allocation3 [shape = 's32[1]{0}', space=sflag, size = 0x4, scoped, tag = 'scoped memory for _forward_impl.1']
    #allocation4 [shape = 'u8[16384]{0}', space=vmem, size = 0x4000, scoped, tag = 'output window, operand 1, single buffered']
    #allocation5 [shape = 's32[1]{0}', space=sflag, size = 0x4, scoped, tag = 'scoped memory for _forward_impl.1']
    #allocation6 [shape = 'u8[16384]{0}', space=vmem, size = 0x4000, scoped, tag = 'output window, operand 2, single buffered']
    %20 = vsyncpa [#allocation3], 0
    %21 = vsyncpa [#allocation5], 0
    // Predicated region
    $region2: #{_forward_impl.1} parent=1 // pred_check
      _
    $region3: #{_forward_impl.1} parent=1 // pred_check_branch
      %23 = sbr.rel (0) target = $region5
    $region4: #{_forward_impl.1} parent=1 // pred_region
      _
    $region5: #{_forward_impl.1} parent=1 // pred_fallthru
      _
    // Predicated region
    $region6: #{_forward_impl.1} parent=1 // pred_check
      _
    $region7: #{_forward_impl.1} parent=1 // pred_check_branch
      %25 = sbr.rel (0) target = $region9
    $region8: #{_forward_impl.1} parent=1 // pred_region
      _
    $region9: #{_forward_impl.1} parent=1 // pred_fallthru
      _
    // Predicated region
    $region10: #{_forward_impl.1} parent=1 // pred_check
      _
    $region11: #{_forward_impl.1} parent=1 // pred_check_branch
      %27 = sbr.rel (0) target = $region13
    $region12: #{_forward_impl.1} parent=1 // pred_region
      _
    $region13: #{_forward_impl.1} parent=1 // pred_fallthru
      _
    // Predicated region
    $region14: #{_forward_impl.1} parent=1 // pred_check
      _
    $region15: #{_forward_impl.1} parent=1 // pred_check_branch
      %29 = sbr.rel (0) target = $region17
    $region16: #{_forward_impl.1} parent=1 // pred_region
      _
    $region17: #{_forward_impl.1} parent=1 // pred_fallthru
      _
    // Predicated region
    $region18: #{_forward_impl.1} parent=1 // pred_check
      _
    $region19: #{_forward_impl.1} parent=1 // pred_check_branch
      %31 = sbr.rel (0) target = $region21
    $region20: #{_forward_impl.1} parent=1 // pred_region
      _
    $region21: #{_forward_impl.1} parent=1 // pred_fallthru
      _
    // Predicated region
    $region22: #{_forward_impl.1} parent=1 // pred_check
      _
    $region23: #{_forward_impl.1} parent=1 // pred_check_branch
      %33 = sbr.rel (0) target = $region25
    $region24: #{_forward_impl.1} parent=1 // pred_region
      _
    $region25: #{_forward_impl.1} parent=1 // pred_fallthru
      _
    // Predicated region
    $region26: #{_forward_impl.1} parent=1 // pred_check
      _
    $region27: #{_forward_impl.1} parent=1 // pred_check_branch
      %35 = sbr.rel (0) target = $region29
    $region28: #{_forward_impl.1} parent=1 // pred_region
      _
    $region29: #{_forward_impl.1} parent=1 // pred_fallthru
      _
    // Predicated region
    $region30: #{_forward_impl.1} parent=1 // pred_check
      _
    $region31: #{_forward_impl.1} parent=1 // pred_check_branch
      %37 = sbr.rel (0) target = $region33
    $region32: #{_forward_impl.1} parent=1 // pred_region
      _
    $region33: #{_forward_impl.1} parent=1 // pred_fallthru
      _
    // Predicated region
    $region34: #{_forward_impl.1} parent=1 // pred_check
      _
    $region35: #{_forward_impl.1} parent=1 // pred_check_branch
      %39 = sbr.rel (0) target = $region37
    $region36: #{_forward_impl.1} parent=1 // pred_region
      _
    $region37: #{_forward_impl.1} parent=1 // pred_fallthru
      _
    // Predicated region
    $region38: #{_forward_impl.1} parent=1 // pred_check
      _
    $region39: #{_forward_impl.1} parent=1 // pred_check_branch
      %41 = sbr.rel (0) target = $region41
    $region40: #{_forward_impl.1} parent=1 // pred_region
      _
    $region41: #{_forward_impl.1} parent=1 // pred_fallthru
      _
    // Predicated region
    $region42: #{_forward_impl.1} parent=1 // pred_check
      _
    $region43: #{_forward_impl.1} parent=1 // pred_check_branch
      %43 = sbr.rel (0) target = $region45
    $region44: #{_forward_impl.1} parent=1 // pred_region
      _
    $region45: #{_forward_impl.1} parent=1 // pred_fallthru
      _
    // Predicated region
    $region46: #{_forward_impl.1} parent=1 // pred_check
      _
    $region47: #{_forward_impl.1} parent=1 // pred_check_branch
      %45 = sbr.rel (0) target = $region49
    $region48: #{_forward_impl.1} parent=1 // pred_region
      _
    $region49: #{_forward_impl.1} parent=1 // pred_fallthru
      _
    %v46 = vld [vmem:[%s0] sm:$0x3]
    %48 = vset.pattern.permute.xlu0 0
    %49 = vperm.xlu0 %48, %v46
    %v50 = vpop.permute.xlu0 %49
    %v52 = vld [vmem:[%s2] sm:$0xff]
    %v53 = vld [vmem:[%s2 + $0x8] sm:$0xff]
    %v54 = vld [vmem:[%s2 + $0x10] sm:$0x1]
    %v55 = vld [vmem:[%s2 + $0x18] sm:$0x1]
    %v56 = vld [vmem:[%s3] sm:$0x3]
    %v58 = vlaneseq
    %v59 = vshrl.u32 %v58, 7
    %v60 = vsub.s32 0, %v59
    %v61 = vrot.slane %v56, %v60
    %v62 = vlaneseq
    %v63 = vshrl.u32 %v62, 7
    %v64 = vsub.s32 1, %v63
    %v65 = vrot.slane %v56, %v64
    %vm68 = vcmask 72704
    %v69 = vsel %vm68, %v50, 0
    %vm71 = vcmask 1040384
    %v73 = vsel %vm71, %v54, 0
    %v76 = vsel %vm71, %v55, 0
    %78 = vmatprep.subr.mxu0 %v53
    %79 = vmatpush1.msra.mxu0 %v52
    %80 = vmatprep.subr.mxu0 %v76
    %81 = vmatpush1.msra.mxu0 %v73
    %82 = vmatprep.subr.mxu0 0.0
    %83 = vmatpush1.msra.mxu0 0.0
    %84 = vmatprep.subr.mxu0 0.0
    %85 = vmatpush1.msra.mxu0 0.0
    %86 = vmatprep.subr.mxu0 0.0
    %87 = vmatpush1.msra.mxu0 0.0
    %88 = vmatprep.subr.mxu0 0.0
    %89 = vmatpush1.msra.mxu0 0.0
    %90 = vmatprep.subr.mxu0 0.0
    %91 = vmatpush1.msra.mxu0 0.0
    %92 = vmatprep.subr.mxu0 0.0
    %93 = vmatpush1.msra.mxu0 0.0
    %94 = vmatprep.subr.mxu0 0.0
    %95 = vmatpush1.msra.mxu0 0.0
    %96 = vmatprep.subr.mxu0 0.0
    %97 = vmatpush1.msra.mxu0 0.0
    %98 = vmatprep.subr.mxu0 0.0
    %99 = vmatpush1.msra.mxu0 0.0
    %100 = vmatprep.subr.mxu0 0.0
    %101 = vmatpush1.msra.mxu0 0.0
    %102 = vmatprep.subr.mxu0 0.0
    %103 = vmatpush1.msra.mxu0 0.0
    %104 = vmatprep.subr.mxu0 0.0
    %105 = vmatpush1.msra.mxu0 0.0
    %106 = vmatprep.subr.mxu0 0.0
    %107 = vmatpush1.msra.mxu0 0.0
    %108 = vmatprep.subr.mxu0 0.0
    %109 = vmatpush1.msra.mxu0 0.0
    %110 = vmatprep.subr.mxu0 0.0
    %111 = vmatpush1.msra.mxu0 0.0
    %112 = vmatprep.subr.mxu0 0.0
    %113 = vmatpush1.msra.mxu0 0.0
    %114 = vmatprep.subr.mxu0 0.0
    %115 = vmatpush1.msra.mxu0 0.0
    %116 = vmatprep.subr.mxu0 0.0
    %117 = vmatpush1.msra.mxu0 0.0
    %118 = vmatprep.subr.mxu0 0.0
    %119 = vmatpush1.msra.mxu0 0.0
    %120 = vmatprep.subr.mxu0 0.0
    %121 = vmatpush1.msra.mxu0 0.0
    %122 = vmatprep.subr.mxu0 0.0
    %123 = vmatpush1.msra.mxu0 0.0
    %124 = vmatprep.subr.mxu0 0.0
    %125 = vmatpush1.msra.mxu0 0.0
    %126 = vmatprep.subr.mxu0 0.0
    %127 = vmatpush1.msra.mxu0 0.0
    %128 = vmatprep.subr.mxu0 0.0
    %129 = vmatpush1.msra.mxu0 0.0
    %130 = vmatprep.subr.mxu0 0.0
    %131 = vmatpush1.msra.mxu0 0.0
    %132 = vmatprep.subr.mxu0 0.0
    %133 = vmatpush1.msra.mxu0 0.0
    %134 = vmatprep.subr.mxu0 0.0
    %135 = vmatpush1.msra.mxu0 0.0
    %136 = vmatprep.subr.mxu0 0.0
    %137 = vmatpush1.msra.mxu0 0.0
    %138 = vmatprep.subr.mxu0 0.0
    %139 = vmatpush1.msra.mxu0 0.0
    %140 = vmatprep.subr.mxu0 0.0
    %141 = vmatpush1.msra.mxu0 0.0
    %142 = vmatprep.mubr.f32.mxu0 0.0
    %143 = vmatmul.mubr.f32.gmra.mrb[0].mxu0 %v69
    %v144 = vpop.f32.mrb[0].mxu0
    %v145 = vadd.f32 %v61, %v144
    %v146 = vpop.f32.mrb[0].mxu0
    %v147 = vadd.f32 %v65, %v146
    %148 = vdwg.mxu0
    %vm149 = vcmp.ge.f32.partialorder %v145, 0.0
    %vm150 = vcmp.ge.f32.partialorder %v147, 0.0
    %v151 = vmul.f32 %v145, 0.02
    %v152 = vmul.f32 %v147, 0.02
    %v153 = vsel %vm149, %v145, %v151
    %v154 = vsel %vm150, %v147, %v152
    %v155 = vld [vmem:[%s4] sm:$0xff]
    %v156 = vld [vmem:[%s4 + $0x8] sm:$0xff]
    %v157 = vld [vmem:[%s4 + $0x10] sm:$0xff]
    %v158 = vld [vmem:[%s4 + $0x18] sm:$0xff]
    %v159 = vld [vmem:[%s4 + $0x20] sm:$0xff]
    %v160 = vld [vmem:[%s4 + $0x28] sm:$0xff]
    %v161 = vld [vmem:[%s4 + $0x30] sm:$0xff]
    %v162 = vld [vmem:[%s4 + $0x38] sm:$0xff]
    %v163 = vld [vmem:[%s4 + $0x40] sm:$0xff]
    %v164 = vld [vmem:[%s4 + $0x48] sm:$0xff]
    %v165 = vld [vmem:[%s4 + $0x50] sm:$0xff]
    %v166 = vld [vmem:[%s4 + $0x58] sm:$0xff]
    %v167 = vld [vmem:[%s4 + $0x60] sm:$0xff]
    %v168 = vld [vmem:[%s4 + $0x68] sm:$0xff]
    %v169 = vld [vmem:[%s4 + $0x70] sm:$0xff]
    %v170 = vld [vmem:[%s4 + $0x78] sm:$0xff]
    %v171 = vld [vmem:[%s4 + $0x80] sm:$0xff]
    %v172 = vld [vmem:[%s4 + $0x88] sm:$0xff]
    %v173 = vld [vmem:[%s4 + $0x90] sm:$0xff]
    %v174 = vld [vmem:[%s4 + $0x98] sm:$0xff]
    %v175 = vld [vmem:[%s4 + $0xa0] sm:$0xff]
    %v176 = vld [vmem:[%s4 + $0xa8] sm:$0xff]
    %v177 = vld [vmem:[%s4 + $0xb0] sm:$0xff]
    %v178 = vld [vmem:[%s4 + $0xb8] sm:$0xff]
    %v179 = vld [vmem:[%s4 + $0xc0] sm:$0xff]
    %v180 = vld [vmem:[%s4 + $0xc8] sm:$0xff]
    %v181 = vld [vmem:[%s4 + $0xd0] sm:$0xff]
    %v182 = vld [vmem:[%s4 + $0xd8] sm:$0xff]
    %v183 = vld [vmem:[%s4 + $0xe0] sm:$0xff]
    %v184 = vld [vmem:[%s4 + $0xe8] sm:$0xff]
    %v185 = vld [vmem:[%s4 + $0xf0] sm:$0xff]
    %v186 = vld [vmem:[%s4 + $0xf8] sm:$0xff]
    %v187 = vld [vmem:[%s4 + $0x100] sm:$0xff]
    %v188 = vld [vmem:[%s4 + $0x108] sm:$0xff]
    %v189 = vld [vmem:[%s4 + $0x110] sm:$0xf]
    %v190 = vld [vmem:[%s4 + $0x118] sm:$0xf]
    %v191 = vld [vmem:[%s5] sm:$0x3]
    %v193 = vlaneseq
    %v194 = vshrl.u32 %v193, 7
    %v195 = vsub.s32 0, %v194
    %v196 = vrot.slane %v191, %v195
    %v197 = vlaneseq
    %v198 = vshrl.u32 %v197, 7
    %v199 = vsub.s32 1, %v198
    %v200 = vrot.slane %v191, %v199
    %vm203 = vcmask 97280
    %v205 = vsel %vm203, %v154, 0
    %vm207 = vcmask 1043456
    %v209 = vsel %vm207, %v189, 0
    %v212 = vsel %vm207, %v190, 0
    %214 = vmatprep.subr.mxu0 %v156
    %215 = vmatpush1.msra.mxu0 %v155
    %216 = vmatprep.subr.mxu0 %v158
    %217 = vmatpush1.msra.mxu0 %v157
    %218 = vmatprep.subr.mxu0 %v160
    %219 = vmatpush1.msra.mxu0 %v159
    %220 = vmatprep.subr.mxu0 %v162
    %221 = vmatpush1.msra.mxu0 %v161
    %222 = vmatprep.subr.mxu0 %v164
    %223 = vmatpush1.msra.mxu0 %v163
    %224 = vmatprep.subr.mxu0 %v166
    %225 = vmatpush1.msra.mxu0 %v165
    %226 = vmatprep.subr.mxu0 %v168
    %227 = vmatpush1.msra.mxu0 %v167
    %228 = vmatprep.subr.mxu0 %v170
    %229 = vmatpush1.msra.mxu0 %v169
    %230 = vmatprep.subr.mxu0 %v172
    %231 = vmatpush1.msra.mxu0 %v171
    %232 = vmatprep.subr.mxu0 %v174
    %233 = vmatpush1.msra.mxu0 %v173
    %234 = vmatprep.subr.mxu0 %v176
    %235 = vmatpush1.msra.mxu0 %v175
    %236 = vmatprep.subr.mxu0 %v178
    %237 = vmatpush1.msra.mxu0 %v177
    %238 = vmatprep.subr.mxu0 %v180
    %239 = vmatpush1.msra.mxu0 %v179
    %240 = vmatprep.subr.mxu0 %v182
    %241 = vmatpush1.msra.mxu0 %v181
    %242 = vmatprep.subr.mxu0 %v184
    %243 = vmatpush1.msra.mxu0 %v183
    %244 = vmatprep.subr.mxu0 %v186
    %245 = vmatpush1.msra.mxu0 %v185
    %246 = vmatprep.subr.mxu0 %v188
    %247 = vmatpush1.msra.mxu0 %v187
    %248 = vmatprep.subr.mxu0 %v212
    %249 = vmatpush1.msra.mxu0 %v209
    %250 = vmatprep.subr.mxu0 0.0
    %251 = vmatpush1.msra.mxu0 0.0
    %252 = vmatprep.subr.mxu0 0.0
    %253 = vmatpush1.msra.mxu0 0.0
    %254 = vmatprep.subr.mxu0 0.0
    %255 = vmatpush1.msra.mxu0 0.0
    %256 = vmatprep.subr.mxu0 0.0
    %257 = vmatpush1.msra.mxu0 0.0
    %258 = vmatprep.subr.mxu0 0.0
    %259 = vmatpush1.msra.mxu0 0.0
    %260 = vmatprep.subr.mxu0 0.0
    %261 = vmatpush1.msra.mxu0 0.0
    %262 = vmatprep.subr.mxu0 0.0
    %263 = vmatpush1.msra.mxu0 0.0
    %264 = vmatprep.subr.mxu0 0.0
    %265 = vmatpush1.msra.mxu0 0.0
    %266 = vmatprep.subr.mxu0 0.0
    %267 = vmatpush1.msra.mxu0 0.0
    %268 = vmatprep.subr.mxu0 0.0
    %269 = vmatpush1.msra.mxu0 0.0
    %270 = vmatprep.subr.mxu0 0.0
    %271 = vmatpush1.msra.mxu0 0.0
    %272 = vmatprep.subr.mxu0 0.0
    %273 = vmatpush1.msra.mxu0 0.0
    %274 = vmatprep.subr.mxu0 0.0
    %275 = vmatpush1.msra.mxu0 0.0
    %276 = vmatprep.subr.mxu0 0.0
    %277 = vmatpush1.msra.mxu0 0.0
    %278 = vmatprep.mubr.f32.mxu0 %v205
    %279 = vmatmul.mubr.f32.gmra.mrb[0].mxu0 %v153
    %v280 = vpop.f32.mrb[0].mxu0
    %v281 = vadd.f32 %v196, %v280
    %v282 = vpop.f32.mrb[0].mxu0
    %v283 = vadd.f32 %v200, %v282
    %284 = vdwg.mxu0
    %vm285 = vcmp.ge.f32.partialorder %v281, 0.0
    %vm286 = vcmp.ge.f32.partialorder %v283, 0.0
    %v287 = vmul.f32 %v281, 0.02
    %v288 = vmul.f32 %v283, 0.02
    %v289 = vsel %vm285, %v281, %v287
    %v290 = vsel %vm286, %v283, %v288
    %v291 = vld [vmem:[%s6] sm:$0xff]
    %v292 = vld [vmem:[%s6 + $0x8] sm:$0xff]
    %v293 = vld [vmem:[%s6 + $0x10] sm:$0xff]
    %v294 = vld [vmem:[%s6 + $0x18] sm:$0xff]
    %v295 = vld [vmem:[%s6 + $0x20] sm:$0xff]
    %v296 = vld [vmem:[%s6 + $0x28] sm:$0xff]
    %v297 = vld [vmem:[%s6 + $0x30] sm:$0xff]
    %v298 = vld [vmem:[%s6 + $0x38] sm:$0xff]
    %v299 = vld [vmem:[%s6 + $0x40] sm:$0xff]
    %v300 = vld [vmem:[%s6 + $0x48] sm:$0xff]
    %v301 = vld [vmem:[%s6 + $0x50] sm:$0xff]
    %v302 = vld [vmem:[%s6 + $0x58] sm:$0xff]
    %v303 = vld [vmem:[%s6 + $0x60] sm:$0xff]
    %v304 = vld [vmem:[%s6 + $0x68] sm:$0xff]
    %v305 = vld [vmem:[%s6 + $0x70] sm:$0xff]
    %v306 = vld [vmem:[%s6 + $0x78] sm:$0xff]
    %v307 = vld [vmem:[%s6 + $0x80] sm:$0xff]
    %v308 = vld [vmem:[%s6 + $0x88] sm:$0xff]
    %v309 = vld [vmem:[%s6 + $0x90] sm:$0xff]
    %v310 = vld [vmem:[%s6 + $0x98] sm:$0xff]
    %v311 = vld [vmem:[%s6 + $0xa0] sm:$0xff]
    %v312 = vld [vmem:[%s6 + $0xa8] sm:$0xff]
    %v313 = vld [vmem:[%s6 + $0xb0] sm:$0xff]
    %v314 = vld [vmem:[%s6 + $0xb8] sm:$0xff]
    %v315 = vld [vmem:[%s6 + $0xc0] sm:$0xff]
    %v316 = vld [vmem:[%s7] sm:$0x1]
    %v318 = vlaneseq
    %v319 = vshrl.u32 %v318, 7
    %v320 = vsub.s32 0, %v319
    %v321 = vrot.slane %v316, %v320
    %vm323 = vcmask 588800
    %v325 = vsel %vm323, %v290, 0
    %327 = vmatprep.subr.mxu0 0.0
    %328 = vmatpush1.msra.mxu0 %v291
    %329 = vmatprep.subr.mxu0 0.0
    %330 = vmatpush1.msra.mxu0 %v292
    %331 = vmatprep.subr.mxu0 0.0
    %332 = vmatpush1.msra.mxu0 %v293
    %333 = vmatprep.subr.mxu0 0.0
    %334 = vmatpush1.msra.mxu0 %v294
    %335 = vmatprep.subr.mxu0 0.0
    %336 = vmatpush1.msra.mxu0 %v295
    %337 = vmatprep.subr.mxu0 0.0
    %338 = vmatpush1.msra.mxu0 %v296
    %339 = vmatprep.subr.mxu0 0.0
    %340 = vmatpush1.msra.mxu0 %v297
    %341 = vmatprep.subr.mxu0 0.0
    %342 = vmatpush1.msra.mxu0 %v298
    %343 = vmatprep.subr.mxu0 0.0
    %344 = vmatpush1.msra.mxu0 %v299
    %345 = vmatprep.subr.mxu0 0.0
    %346 = vmatpush1.msra.mxu0 %v300
    %347 = vmatprep.subr.mxu0 0.0
    %348 = vmatpush1.msra.mxu0 %v301
    %349 = vmatprep.subr.mxu0 0.0
    %350 = vmatpush1.msra.mxu0 %v302
    %351 = vmatprep.subr.mxu0 0.0
    %352 = vmatpush1.msra.mxu0 %v303
    %353 = vmatprep.subr.mxu0 0.0
    %354 = vmatpush1.msra.mxu0 %v304
    %355 = vmatprep.subr.mxu0 0.0
    %356 = vmatpush1.msra.mxu0 %v305
    %357 = vmatprep.subr.mxu0 0.0
    %358 = vmatpush1.msra.mxu0 %v306
    %359 = vmatprep.subr.mxu0 0.0
    %360 = vmatpush1.msra.mxu0 %v307
    %361 = vmatprep.subr.mxu0 0.0
    %362 = vmatpush1.msra.mxu0 %v308
    %363 = vmatprep.subr.mxu0 0.0
    %364 = vmatpush1.msra.mxu0 %v309
    %365 = vmatprep.subr.mxu0 0.0
    %366 = vmatpush1.msra.mxu0 %v310
    %367 = vmatprep.subr.mxu0 0.0
    %368 = vmatpush1.msra.mxu0 %v311
    %369 = vmatprep.subr.mxu0 0.0
    %370 = vmatpush1.msra.mxu0 %v312
    %371 = vmatprep.subr.mxu0 0.0
    %372 = vmatpush1.msra.mxu0 %v313
    %373 = vmatprep.subr.mxu0 0.0
    %374 = vmatpush1.msra.mxu0 %v314
    %375 = vmatprep.subr.mxu0 0.0
    %376 = vmatpush1.msra.mxu0 %v315
    %377 = vmatprep.subr.mxu0 0.0
    %378 = vmatpush1.msra.mxu0 0.0
    %379 = vmatprep.subr.mxu0 0.0
    %380 = vmatpush1.msra.mxu0 0.0
    %381 = vmatprep.subr.mxu0 0.0
    %382 = vmatpush1.msra.mxu0 0.0
    %383 = vmatprep.subr.mxu0 0.0
    %384 = vmatpush1.msra.mxu0 0.0
    %385 = vmatprep.subr.mxu0 0.0
    %386 = vmatpush1.msra.mxu0 0.0
    %387 = vmatprep.subr.mxu0 0.0
    %388 = vmatpush1.msra.mxu0 0.0
    %389 = vmatprep.subr.mxu0 0.0
    %390 = vmatpush1.msra.mxu0 0.0
    %391 = vmatprep.mubr.f32.mxu0 %v325
    %392 = vmatmul.mubr.f32.gmra.mrb[0].mxu0 %v289
    %v393 = vpop.f32.mrb[0].mxu0
    %v394 = vadd.f32 %v321, %v393
    %v395 = vpop.f32.mrb[0].mxu0
    %396 = vdwg.mxu0
    %v397 = vld [vmem:[%s1] sm:$0x1]
    %v399 = vlaneseq
    %v400 = vshrl.u32 %v399, 7
    %v401 = vsub.s32 0, %v400
    %v402 = vrot.slane %v397, %v401
    %v404 = vadd.f32 %v402, %v394
    %v405 = vmul.f32 %v404, %v50
    %vm406 = vcmask 66560
    %407 = vst.msk [vmem:[#allocation2] sm:$0x3] %vm406, %v405
    %v408 = vld [vmem:[%s9] sm:$0xff]
    %v409 = vld [vmem:[%s9 + $0x8] sm:$0xff]
    %v410 = vld [vmem:[%s10] sm:$0xff]
    %v411 = vld [vmem:[%s10 + $0x8] sm:$0xff]
    %v412 = vld [vmem:[%s11] sm:$0xff]
    %v413 = vld [vmem:[%s11 + $0x8] sm:$0xff]
    %v414 = vld [vmem:[%s8] sm:$0xff]
    %v415 = vld [vmem:[%s8 + $0x8] sm:$0xff]
    %s417 = vtos %v405
    %v418 = vstv %s417
    %v420 = vmul.f32 %v418, %v414
    %v421 = vmul.f32 %v418, %v415
    %s422 = scalar_lea.vmem %s8, 16
    %v423 = vld [vmem:[%s422] sm:$0xff]
    %v424 = vld [vmem:[%s422 + $0x8] sm:$0xff]
    %425 = vrot.lane.b32.xlu0 %v405, 127
    %v426 = vpop.permute.xlu0 %425
    %s427 = vtos %v426
    %v428 = vstv %s427
    %v430 = vmul.f32 %v428, %v423
    %v431 = vmul.f32 %v428, %v424
    %v432 = vadd.f32 %v420, %v430
    %v433 = vadd.f32 %v421, %v431
    %s434 = scalar_lea.vmem %s8, 32
    %v435 = vld [vmem:[%s434] sm:$0xff]
    %v436 = vld [vmem:[%s434 + $0x8] sm:$0xff]
    %437 = vrot.lane.b32.xlu0 %v405, 126
    %v438 = vpop.permute.xlu0 %437
    %s439 = vtos %v438
    %v440 = vstv %s439
    %v442 = vmul.f32 %v440, %v435
    %v443 = vmul.f32 %v440, %v436
    %v444 = vadd.f32 %v432, %v442
    %v445 = vadd.f32 %v433, %v443
    %s446 = scalar_lea.vmem %s8, 48
    %v447 = vld [vmem:[%s446] sm:$0xff]
    %v448 = vld [vmem:[%s446 + $0x8] sm:$0xff]
    %449 = vrot.lane.b32.xlu0 %v405, 125
    %v450 = vpop.permute.xlu0 %449
    %s451 = vtos %v450
    %v452 = vstv %s451
    %v454 = vmul.f32 %v452, %v447
    %v455 = vmul.f32 %v452, %v448
    %v456 = vadd.f32 %v444, %v454
    %v457 = vadd.f32 %v445, %v455
    %s458 = scalar_lea.vmem %s8, 64
    %v459 = vld [vmem:[%s458] sm:$0xff]
    %v460 = vld [vmem:[%s458 + $0x8] sm:$0xff]
    %461 = vrot.lane.b32.xlu0 %v405, 124
    %v462 = vpop.permute.xlu0 %461
    %s463 = vtos %v462
    %v464 = vstv %s463
    %v466 = vmul.f32 %v464, %v459
    %v467 = vmul.f32 %v464, %v460
    %v468 = vadd.f32 %v456, %v466
    %v469 = vadd.f32 %v457, %v467
    %s470 = scalar_lea.vmem %s8, 80
    %v471 = vld [vmem:[%s470] sm:$0xff]
    %v472 = vld [vmem:[%s470 + $0x8] sm:$0xff]
    %473 = vrot.lane.b32.xlu0 %v405, 123
    %v474 = vpop.permute.xlu0 %473
    %s475 = vtos %v474
    %v476 = vstv %s475
    %v478 = vmul.f32 %v476, %v471
    %v479 = vmul.f32 %v476, %v472
    %v480 = vadd.f32 %v468, %v478
    %v481 = vadd.f32 %v469, %v479
    %s482 = scalar_lea.vmem %s8, 96
    %v483 = vld [vmem:[%s482] sm:$0xff]
    %v484 = vld [vmem:[%s482 + $0x8] sm:$0xff]
    %485 = vrot.lane.b32.xlu0 %v405, 122
    %v486 = vpop.permute.xlu0 %485
    %s487 = vtos %v486
    %v488 = vstv %s487
    %v490 = vmul.f32 %v488, %v483
    %v491 = vmul.f32 %v488, %v484
    %v492 = vadd.f32 %v480, %v490
    %v493 = vadd.f32 %v481, %v491
    %s494 = scalar_lea.vmem %s8, 112
    %v495 = vld [vmem:[%s494] sm:$0xff]
    %v496 = vld [vmem:[%s494 + $0x8] sm:$0xff]
    %497 = vrot.lane.b32.xlu0 %v405, 121
    %v498 = vpop.permute.xlu0 %497
    %s499 = vtos %v498
    %v500 = vstv %s499
    %v502 = vmul.f32 %v500, %v495
    %v503 = vmul.f32 %v500, %v496
    %v504 = vadd.f32 %v492, %v502
    %v505 = vadd.f32 %v493, %v503
    %s506 = scalar_lea.vmem %s8, 128
    %v507 = vld [vmem:[%s506] sm:$0xff]
    %v508 = vld [vmem:[%s506 + $0x8] sm:$0xff]
    %509 = vrot.lane.b32.xlu0 %v405, 120
    %v510 = vpop.permute.xlu0 %509
    %s511 = vtos %v510
    %v512 = vstv %s511
    %v514 = vmul.f32 %v512, %v507
    %v515 = vmul.f32 %v512, %v508
    %v516 = vadd.f32 %v504, %v514
    %v517 = vadd.f32 %v505, %v515
    %vm518 = vcmask 130048
    %519 = vst.msk [vmem:[#allocation4] sm:$0xff] %vm518, %v516
    %520 = vst.msk [vmem:[#allocation4 + $0x8] sm:$0xff] %vm518, %v517
    %v521 = vmul.f32 %v516, 6.2831855
    %v522 = vmul.f32 %v517, 6.2831855
    %v523 = vand.u32 2147483647, %v521
    %vm524 = vcmp.le.f32.partialorder %v523, 0.7853982
    %vm525 = vcmp.lt.s32.totalorder %v521, 0
    %v526 = vand.u32 %v521, 2139095040
    %v527 = vshrl.u32 %v526, 23
    %v528 = vsub.s32 %v527, 127
    %v529 = vand.u32 2147483647, %v521
    %v530 = vand.u32 %v529, 8388607
    %v531 = vor.u32 %v530, 8388608
    %v532 = vsub.s32 0, %v531
    %v533 = vadd.s32 %v528, 1
    %vm534 = vcmp.gt.s32.totalorder %v533, 0
    %v535 = vsel %vm534, %v533, 0
    %v536 = vshrl.u32 %v535, 5
    %v537 = vand.u32 %v535, 31
    %v538 = vsub.s32 32, %v537
    %v539 = vshrl.u32 683565275, %v538
    %v540 = vshll.u32 683565275, %v537
    %v541 = vshrl.u32 2475754826, %v538
    %v542 = vor.u32 %v540, %v541
    %v543 = vshll.u32 2475754826, %v537
    %v544 = vshrl.u32 2131351028, %v538
    %v545 = vor.u32 %v543, %v544
    %v546 = vshll.u32 2131351028, %v537
    %v547 = vshrl.u32 2102212464, %v538
    %v548 = vor.u32 %v546, %v547
    %v549 = vshll.u32 2102212464, %v537
    %v550 = vshrl.u32 920167782, %v538
    %v551 = vor.u32 %v549, %v550
    %v552 = vshll.u32 920167782, %v537
    %v553 = vshrl.u32 1326507024, %v538
    %v554 = vor.u32 %v552, %v553
    %vm555 = vcmp.lt.s32.totalorder %v536, 1
    %vm556 = vcmp.lt.s32.totalorder %v536, 2
    %vm557 = vcmp.lt.s32.totalorder %v536, 3
    %vm558 = vcmp.lt.s32.totalorder %v536, 4
    %v559 = vsel %vm555, %v539, %v542
    %v560 = vsel %vm558, %v548, 2102212464
    %v561 = vsel %vm557, %v545, %v560
    %v562 = vsel %vm556, %v559, %v561
    %v563 = vsel %vm555, %v542, %v545
    %v564 = vsel %vm558, %v551, 920167782
    %v565 = vsel %vm557, %v548, %v564
    %v566 = vsel %vm556, %v563, %v565
    %v567 = vsel %vm555, %v545, %v548
    %v568 = vsel %vm558, %v554, 1326507024
    %v569 = vsel %vm557, %v551, %v568
    %v570 = vsel %vm556, %v567, %v569
    %v571 = vshll.u32 %v531, 8
    %v572 = vmul.u32.u64.compose %v571, %v570
    %v573 = vextract.low.u32 %v572
    %v574 = vextract.high.u32 %v572
    %v575 = vmul.u32.u64.compose %v571, %v566
    %v576 = vextract.low.u32 %v575
    %v577 = vextract.high.u32 %v575
    %v578 = vmul.u32 %v571, %v562
    %v579 = vadd.s32 %v574, %v576
    %vm580 = vc.u32 %v574, %v576
    %v581 = vadd.s32 %v577, 1
    %v582 = vsel %vm580, %v581, %v577
    %v583 = vadd.s32 %v578, %v582
    %v584 = vadd.s32 %v583, 536870912
    %v585 = vshrl.u32 %v584, 30
    %v586 = vshll.u32 %v585, 30
    %v587 = vsub.s32 %v583, %v586
    %vm588 = vcmp.lt.s32.totalorder %v587, 0
    %v589 = vsub.s32 0, %v587
    %v590 = vsel %vm588, %v589, %v587
    %v591 = vclz %v590
    %v592 = vsub.s32 %v591, 2
    %vm593 = vcmp.gt.s32.totalorder 0, %v592
    %v594 = vsel %vm593, 0, %v592
    %v595 = vsub.s32 32, %v594
    %v596 = vshll.u32 %v587, %v594
    %v597 = vshrl.u32 %v579, %v595
    %v598 = vor.u32 %v596, %v597
    %v599 = vsub.s32 4294967266, %v594
    %v600 = vadd.s32 %v599, 127
    %v601 = vshll.u32 %v600, 23
    %v602 = vor.u32 4788187, %v601
    %v603 = vand.u32 2147483647, %v602
    %v605 = vcvt.s32.f32 %v598
    %v606 = vmul.f32 %v605, %v603
    %v607 = vxor.u32 %v606, 2147483648
    %v608 = vsel %vm525, %v607, %v606
    %v609 = vsub.s32 4, %v585
    %v610 = vsel %vm525, %v609, %v585
    %v611 = vsel %vm524, %v521, %v608
    %v612 = vsel %vm524, 0, %v610
    %v613 = vcosq.f32.pop %v611
    %v614 = vsinq.f32.pop %v611
    %vm615 = vweird.f32 %v521
    %v616 = vand.u32 %v612, 3
    %vm617 = vcmp.lt.s32.totalorder %v616, 2
    %vm618 = vcmp.eq.s32.totalorder %v616, 0
    %v619 = vxor.u32 %v614, 2147483648
    %v620 = vsel %vm618, %v613, %v619
    %vm621 = vcmp.eq.s32.totalorder %v616, 2
    %v622 = vxor.u32 %v613, 2147483648
    %v623 = vsel %vm621, %v622, %v614
    %v624 = vsel %vm617, %v620, %v623
    %v625 = vsel %vm615, nan, %v624
    %v626 = vand.u32 2147483647, %v522
    %vm627 = vcmp.le.f32.partialorder %v626, 0.7853982
    %vm628 = vcmp.lt.s32.totalorder %v522, 0
    %v629 = vand.u32 %v522, 2139095040
    %v630 = vshrl.u32 %v629, 23
    %v631 = vsub.s32 %v630, 127
    %v632 = vand.u32 2147483647, %v522
    %v633 = vand.u32 %v632, 8388607
    %v634 = vor.u32 %v633, 8388608
    %v635 = vsub.s32 0, %v634
    %v636 = vadd.s32 %v631, 1
    %vm637 = vcmp.gt.s32.totalorder %v636, 0
    %v638 = vsel %vm637, %v636, 0
    %v639 = vshrl.u32 %v638, 5
    %v640 = vand.u32 %v638, 31
    %v641 = vsub.s32 32, %v640
    %v642 = vshrl.u32 683565275, %v641
    %v643 = vshll.u32 683565275, %v640
    %v644 = vshrl.u32 2475754826, %v641
    %v645 = vor.u32 %v643, %v644
    %v646 = vshll.u32 2475754826, %v640
    %v647 = vshrl.u32 2131351028, %v641
    %v648 = vor.u32 %v646, %v647
    %v649 = vshll.u32 2131351028, %v640
    %v650 = vshrl.u32 2102212464, %v641
    %v651 = vor.u32 %v649, %v650
    %v652 = vshll.u32 2102212464, %v640
    %v653 = vshrl.u32 920167782, %v641
    %v654 = vor.u32 %v652, %v653
    %v655 = vshll.u32 920167782, %v640
    %v656 = vshrl.u32 1326507024, %v641
    %v657 = vor.u32 %v655, %v656
    %vm658 = vcmp.lt.s32.totalorder %v639, 1
    %vm659 = vcmp.lt.s32.totalorder %v639, 2
    %vm660 = vcmp.lt.s32.totalorder %v639, 3
    %vm661 = vcmp.lt.s32.totalorder %v639, 4
    %v662 = vsel %vm658, %v642, %v645
    %v663 = vsel %vm661, %v651, 2102212464
    %v664 = vsel %vm660, %v648, %v663
    %v665 = vsel %vm659, %v662, %v664
    %v666 = vsel %vm658, %v645, %v648
    %v667 = vsel %vm661, %v654, 920167782
    %v668 = vsel %vm660, %v651, %v667
    %v669 = vsel %vm659, %v666, %v668
    %v670 = vsel %vm658, %v648, %v651
    %v671 = vsel %vm661, %v657, 1326507024
    %v672 = vsel %vm660, %v654, %v671
    %v673 = vsel %vm659, %v670, %v672
    %v674 = vshll.u32 %v634, 8
    %v675 = vmul.u32.u64.compose %v674, %v673
    %v676 = vextract.low.u32 %v675
    %v677 = vextract.high.u32 %v675
    %v678 = vmul.u32.u64.compose %v674, %v669
    %v679 = vextract.low.u32 %v678
    %v680 = vextract.high.u32 %v678
    %v681 = vmul.u32 %v674, %v665
    %v682 = vadd.s32 %v677, %v679
    %vm683 = vc.u32 %v677, %v679
    %v684 = vadd.s32 %v680, 1
    %v685 = vsel %vm683, %v684, %v680
    %v686 = vadd.s32 %v681, %v685
    %v687 = vadd.s32 %v686, 536870912
    %v688 = vshrl.u32 %v687, 30
    %v689 = vshll.u32 %v688, 30
    %v690 = vsub.s32 %v686, %v689
    %vm691 = vcmp.lt.s32.totalorder %v690, 0
    %v692 = vsub.s32 0, %v690
    %v693 = vsel %vm691, %v692, %v690
    %v694 = vclz %v693
    %v695 = vsub.s32 %v694, 2
    %vm696 = vcmp.gt.s32.totalorder 0, %v695
    %v697 = vsel %vm696, 0, %v695
    %v698 = vsub.s32 32, %v697
    %v699 = vshll.u32 %v690, %v697
    %v700 = vshrl.u32 %v682, %v698
    %v701 = vor.u32 %v699, %v700
    %v702 = vsub.s32 4294967266, %v697
    %v703 = vadd.s32 %v702, 127
    %v704 = vshll.u32 %v703, 23
    %v705 = vor.u32 4788187, %v704
    %v706 = vand.u32 2147483647, %v705
    %v708 = vcvt.s32.f32 %v701
    %v709 = vmul.f32 %v708, %v706
    %v710 = vxor.u32 %v709, 2147483648
    %v711 = vsel %vm628, %v710, %v709
    %v712 = vsub.s32 4, %v688
    %v713 = vsel %vm628, %v712, %v688
    %v714 = vsel %vm627, %v522, %v711
    %v715 = vsel %vm627, 0, %v713
    %v716 = vcosq.f32.pop %v714
    %v717 = vsinq.f32.pop %v714
    %vm718 = vweird.f32 %v522
    %v719 = vand.u32 %v715, 3
    %vm720 = vcmp.lt.s32.totalorder %v719, 2
    %vm721 = vcmp.eq.s32.totalorder %v719, 0
    %v722 = vxor.u32 %v717, 2147483648
    %v723 = vsel %vm721, %v716, %v722
    %vm724 = vcmp.eq.s32.totalorder %v719, 2
    %v725 = vxor.u32 %v716, 2147483648
    %v726 = vsel %vm724, %v725, %v717
    %v727 = vsel %vm720, %v723, %v726
    %v728 = vsel %vm718, nan, %v727
    %v729 = vand.u32 2147483647, %v521
    %vm730 = vcmp.le.f32.partialorder %v729, 0.7853982
    %vm731 = vcmp.lt.s32.totalorder %v521, 0
    %v732 = vand.u32 %v521, 2139095040
    %v733 = vshrl.u32 %v732, 23
    %v734 = vsub.s32 %v733, 127
    %v735 = vand.u32 2147483647, %v521
    %v736 = vand.u32 %v735, 8388607
    %v737 = vor.u32 %v736, 8388608
    %v738 = vsub.s32 0, %v737
    %v739 = vadd.s32 %v734, 1
    %vm740 = vcmp.gt.s32.totalorder %v739, 0
    %v741 = vsel %vm740, %v739, 0
    %v742 = vshrl.u32 %v741, 5
    %v743 = vand.u32 %v741, 31
    %v744 = vsub.s32 32, %v743
    %v745 = vshrl.u32 683565275, %v744
    %v746 = vshll.u32 683565275, %v743
    %v747 = vshrl.u32 2475754826, %v744
    %v748 = vor.u32 %v746, %v747
    %v749 = vshll.u32 2475754826, %v743
    %v750 = vshrl.u32 2131351028, %v744
    %v751 = vor.u32 %v749, %v750
    %v752 = vshll.u32 2131351028, %v743
    %v753 = vshrl.u32 2102212464, %v744
    %v754 = vor.u32 %v752, %v753
    %v755 = vshll.u32 2102212464, %v743
    %v756 = vshrl.u32 920167782, %v744
    %v757 = vor.u32 %v755, %v756
    %v758 = vshll.u32 920167782, %v743
    %v759 = vshrl.u32 1326507024, %v744
    %v760 = vor.u32 %v758, %v759
    %vm761 = vcmp.lt.s32.totalorder %v742, 1
    %vm762 = vcmp.lt.s32.totalorder %v742, 2
    %vm763 = vcmp.lt.s32.totalorder %v742, 3
    %vm764 = vcmp.lt.s32.totalorder %v742, 4
    %v765 = vsel %vm761, %v745, %v748
    %v766 = vsel %vm764, %v754, 2102212464
    %v767 = vsel %vm763, %v751, %v766
    %v768 = vsel %vm762, %v765, %v767
    %v769 = vsel %vm761, %v748, %v751
    %v770 = vsel %vm764, %v757, 920167782
    %v771 = vsel %vm763, %v754, %v770
    %v772 = vsel %vm762, %v769, %v771
    %v773 = vsel %vm761, %v751, %v754
    %v774 = vsel %vm764, %v760, 1326507024
    %v775 = vsel %vm763, %v757, %v774
    %v776 = vsel %vm762, %v773, %v775
    %v777 = vshll.u32 %v737, 8
    %v778 = vmul.u32.u64.compose %v777, %v776
    %v779 = vextract.low.u32 %v778
    %v780 = vextract.high.u32 %v778
    %v781 = vmul.u32.u64.compose %v777, %v772
    %v782 = vextract.low.u32 %v781
    %v783 = vextract.high.u32 %v781
    %v784 = vmul.u32 %v777, %v768
    %v785 = vadd.s32 %v780, %v782
    %vm786 = vc.u32 %v780, %v782
    %v787 = vadd.s32 %v783, 1
    %v788 = vsel %vm786, %v787, %v783
    %v789 = vadd.s32 %v784, %v788
    %v790 = vadd.s32 %v789, 536870912
    %v791 = vshrl.u32 %v790, 30
    %v792 = vshll.u32 %v791, 30
    %v793 = vsub.s32 %v789, %v792
    %vm794 = vcmp.lt.s32.totalorder %v793, 0
    %v795 = vsub.s32 0, %v793
    %v796 = vsel %vm794, %v795, %v793
    %v797 = vclz %v796
    %v798 = vsub.s32 %v797, 2
    %vm799 = vcmp.gt.s32.totalorder 0, %v798
    %v800 = vsel %vm799, 0, %v798
    %v801 = vsub.s32 32, %v800
    %v802 = vshll.u32 %v793, %v800
    %v803 = vshrl.u32 %v785, %v801
    %v804 = vor.u32 %v802, %v803
    %v805 = vsub.s32 4294967266, %v800
    %v806 = vadd.s32 %v805, 127
    %v807 = vshll.u32 %v806, 23
    %v808 = vor.u32 4788187, %v807
    %v809 = vand.u32 2147483647, %v808
    %v811 = vcvt.s32.f32 %v804
    %v812 = vmul.f32 %v811, %v809
    %v813 = vxor.u32 %v812, 2147483648
    %v814 = vsel %vm731, %v813, %v812
    %v815 = vsub.s32 4, %v791
    %v816 = vsel %vm731, %v815, %v791
    %v817 = vsel %vm730, %v521, %v814
    %v818 = vsel %vm730, 0, %v816
    %v819 = vcosq.f32.pop %v817
    %v820 = vsinq.f32.pop %v817
    %vm821 = vweird.f32 %v521
    %v822 = vadd.s32 %v818, 3
    %v823 = vand.u32 %v822, 3
    %vm824 = vcmp.lt.s32.totalorder %v823, 2
    %vm825 = vcmp.eq.s32.totalorder %v823, 0
    %v826 = vxor.u32 %v820, 2147483648
    %v827 = vsel %vm825, %v819, %v826
    %vm828 = vcmp.eq.s32.totalorder %v823, 2
    %v829 = vxor.u32 %v819, 2147483648
    %v830 = vsel %vm828, %v829, %v820
    %v831 = vsel %vm824, %v827, %v830
    %v832 = vsel %vm821, nan, %v831
    %v833 = vand.u32 2147483647, %v522
    %vm834 = vcmp.le.f32.partialorder %v833, 0.7853982
    %vm835 = vcmp.lt.s32.totalorder %v522, 0
    %v836 = vand.u32 %v522, 2139095040
    %v837 = vshrl.u32 %v836, 23
    %v838 = vsub.s32 %v837, 127
    %v839 = vand.u32 2147483647, %v522
    %v840 = vand.u32 %v839, 8388607
    %v841 = vor.u32 %v840, 8388608
    %v842 = vsub.s32 0, %v841
    %v843 = vadd.s32 %v838, 1
    %vm844 = vcmp.gt.s32.totalorder %v843, 0
    %v845 = vsel %vm844, %v843, 0
    %v846 = vshrl.u32 %v845, 5
    %v847 = vand.u32 %v845, 31
    %v848 = vsub.s32 32, %v847
    %v849 = vshrl.u32 683565275, %v848
    %v850 = vshll.u32 683565275, %v847
    %v851 = vshrl.u32 2475754826, %v848
    %v852 = vor.u32 %v850, %v851
    %v853 = vshll.u32 2475754826, %v847
    %v854 = vshrl.u32 2131351028, %v848
    %v855 = vor.u32 %v853, %v854
    %v856 = vshll.u32 2131351028, %v847
    %v857 = vshrl.u32 2102212464, %v848
    %v858 = vor.u32 %v856, %v857
    %v859 = vshll.u32 2102212464, %v847
    %v860 = vshrl.u32 920167782, %v848
    %v861 = vor.u32 %v859, %v860
    %v862 = vshll.u32 920167782, %v847
    %v863 = vshrl.u32 1326507024, %v848
    %v864 = vor.u32 %v862, %v863
    %vm865 = vcmp.lt.s32.totalorder %v846, 1
    %vm866 = vcmp.lt.s32.totalorder %v846, 2
    %vm867 = vcmp.lt.s32.totalorder %v846, 3
    %vm868 = vcmp.lt.s32.totalorder %v846, 4
    %v869 = vsel %vm865, %v849, %v852
    %v870 = vsel %vm868, %v858, 2102212464
    %v871 = vsel %vm867, %v855, %v870
    %v872 = vsel %vm866, %v869, %v871
    %v873 = vsel %vm865, %v852, %v855
    %v874 = vsel %vm868, %v861, 920167782
    %v875 = vsel %vm867, %v858, %v874
    %v876 = vsel %vm866, %v873, %v875
    %v877 = vsel %vm865, %v855, %v858
    %v878 = vsel %vm868, %v864, 1326507024
    %v879 = vsel %vm867, %v861, %v878
    %v880 = vsel %vm866, %v877, %v879
    %v881 = vshll.u32 %v841, 8
    %v882 = vmul.u32.u64.compose %v881, %v880
    %v883 = vextract.low.u32 %v882
    %v884 = vextract.high.u32 %v882
    %v885 = vmul.u32.u64.compose %v881, %v876
    %v886 = vextract.low.u32 %v885
    %v887 = vextract.high.u32 %v885
    %v888 = vmul.u32 %v881, %v872
    %v889 = vadd.s32 %v884, %v886
    %vm890 = vc.u32 %v884, %v886
    %v891 = vadd.s32 %v887, 1
    %v892 = vsel %vm890, %v891, %v887
    %v893 = vadd.s32 %v888, %v892
    %v894 = vadd.s32 %v893, 536870912
    %v895 = vshrl.u32 %v894, 30
    %v896 = vshll.u32 %v895, 30
    %v897 = vsub.s32 %v893, %v896
    %vm898 = vcmp.lt.s32.totalorder %v897, 0
    %v899 = vsub.s32 0, %v897
    %v900 = vsel %vm898, %v899, %v897
    %v901 = vclz %v900
    %v902 = vsub.s32 %v901, 2
    %vm903 = vcmp.gt.s32.totalorder 0, %v902
    %v904 = vsel %vm903, 0, %v902
    %v905 = vsub.s32 32, %v904
    %v906 = vshll.u32 %v897, %v904
    %v907 = vshrl.u32 %v889, %v905
    %v908 = vor.u32 %v906, %v907
    %v909 = vsub.s32 4294967266, %v904
    %v910 = vadd.s32 %v909, 127
    %v911 = vshll.u32 %v910, 23
    %v912 = vor.u32 4788187, %v911
    %v913 = vand.u32 2147483647, %v912
    %v915 = vcvt.s32.f32 %v908
    %v916 = vmul.f32 %v915, %v913
    %v917 = vxor.u32 %v916, 2147483648
    %v918 = vsel %vm835, %v917, %v916
    %v919 = vsub.s32 4, %v895
    %v920 = vsel %vm835, %v919, %v895
    %v921 = vsel %vm834, %v522, %v918
    %v922 = vsel %vm834, 0, %v920
    %v923 = vcosq.f32.pop %v921
    %v924 = vsinq.f32.pop %v921
    %vm925 = vweird.f32 %v522
    %v926 = vadd.s32 %v922, 3
    %v927 = vand.u32 %v926, 3
    %vm928 = vcmp.lt.s32.totalorder %v927, 2
    %vm929 = vcmp.eq.s32.totalorder %v927, 0
    %v930 = vxor.u32 %v924, 2147483648
    %v931 = vsel %vm929, %v923, %v930
    %vm932 = vcmp.eq.s32.totalorder %v927, 2
    %v933 = vxor.u32 %v923, 2147483648
    %v934 = vsel %vm932, %v933, %v924
    %v935 = vsel %vm928, %v931, %v934
    %v936 = vsel %vm925, nan, %v935
    %v937 = vsub.f32 0.0, %v832
    %v938 = vsub.f32 0.0, %v936
    %vm939 = vcmp.eq.f32.partialorder %v625, 1.0
    %vm940 = vcmp.eq.f32.partialorder %v728, 1.0
    %vm941 = vcmp.eq.f32.partialorder %v937, 0.0
    %vm942 = vcmp.eq.f32.partialorder %v938, 0.0
    %vm943 = vmand %vm939, %vm941
    %vm944 = vmand %vm940, %vm942
    %v945 = vsel %vm943, 0.0, %v625
    %v946 = vsel %vm944, 0.0, %v728
    %v947 = vsel %vm943, 0.0, %v937
    %v948 = vsel %vm944, 0.0, %v938
    %v949 = vadd.f32 %v945, %v947
    %v950 = vadd.f32 %v946, %v948
    %v952 = vsel %vm518, %v408, 0
    %v955 = vsel %vm518, %v409, 0
    %957 = vmatprep.subr.mxu0 0.0
    %958 = vmatpush1.msra.mxu0 %v945
    %959 = vmatprep.subr.mxu0 0.0
    %960 = vmatpush1.msra.mxu0 %v946
    %961 = vmatprep.subr.mxu0 0.0
    %962 = vmatpush1.msra.mxu0 0.0
    %963 = vmatprep.subr.mxu0 0.0
    %964 = vmatpush1.msra.mxu0 0.0
    %965 = vmatprep.subr.mxu0 0.0
    %966 = vmatpush1.msra.mxu0 0.0
    %967 = vmatprep.subr.mxu0 0.0
    %968 = vmatpush1.msra.mxu0 0.0
    %969 = vmatprep.subr.mxu0 0.0
    %970 = vmatpush1.msra.mxu0 0.0
    %971 = vmatprep.subr.mxu0 0.0
    %972 = vmatpush1.msra.mxu0 0.0
    %973 = vmatprep.subr.mxu0 0.0
    %974 = vmatpush1.msra.mxu0 0.0
    %975 = vmatprep.subr.mxu0 0.0
    %976 = vmatpush1.msra.mxu0 0.0
    %977 = vmatprep.subr.mxu0 0.0
    %978 = vmatpush1.msra.mxu0 0.0
    %979 = vmatprep.subr.mxu0 0.0
    %980 = vmatpush1.msra.mxu0 0.0
    %981 = vmatprep.subr.mxu0 0.0
    %982 = vmatpush1.msra.mxu0 0.0
    %983 = vmatprep.subr.mxu0 0.0
    %984 = vmatpush1.msra.mxu0 0.0
    %985 = vmatprep.subr.mxu0 0.0
    %986 = vmatpush1.msra.mxu0 0.0
    %987 = vmatprep.subr.mxu0 0.0
    %988 = vmatpush1.msra.mxu0 0.0
    %989 = vmatprep.subr.mxu0 0.0
    %990 = vmatpush1.msra.mxu0 0.0
    %991 = vmatprep.subr.mxu0 0.0
    %992 = vmatpush1.msra.mxu0 0.0
    %993 = vmatprep.subr.mxu0 0.0
    %994 = vmatpush1.msra.mxu0 0.0
    %995 = vmatprep.subr.mxu0 0.0
    %996 = vmatpush1.msra.mxu0 0.0
    %997 = vmatprep.subr.mxu0 0.0
    %998 = vmatpush1.msra.mxu0 0.0
    %999 = vmatprep.subr.mxu0 0.0
    %1000 = vmatpush1.msra.mxu0 0.0
    %1001 = vmatprep.subr.mxu0 0.0
    %1002 = vmatpush1.msra.mxu0 0.0
    %1003 = vmatprep.subr.mxu0 0.0
    %1004 = vmatpush1.msra.mxu0 0.0
    %1005 = vmatprep.subr.mxu0 0.0
    %1006 = vmatpush1.msra.mxu0 0.0
    %1007 = vmatprep.subr.mxu0 0.0
    %1008 = vmatpush1.msra.mxu0 0.0
    %1009 = vmatprep.subr.mxu0 0.0
    %1010 = vmatpush1.msra.mxu0 0.0
    %1011 = vmatprep.subr.mxu0 0.0
    %1012 = vmatpush1.msra.mxu0 0.0
    %1013 = vmatprep.subr.mxu0 0.0
    %1014 = vmatpush1.msra.mxu0 0.0
    %1015 = vmatprep.subr.mxu0 0.0
    %1016 = vmatpush1.msra.mxu0 0.0
    %1017 = vmatprep.subr.mxu0 0.0
    %1018 = vmatpush1.msra.mxu0 0.0
    %1019 = vmatprep.subr.mxu0 0.0
    %1020 = vmatpush1.msra.mxu0 0.0
    %1021 = vmatprep.mubr.f32.mxu0 0.0
    %1022 = vmatmul.mubr.f32.gmra.mrb[0].mxu0 %v952
    %v1023 = vpop.f32.mrb[0].mxu0
    %v1024 = vadd.f32 0.0, %v1023
    %v1025 = vpop.f32.mrb[0].mxu0
    %1026 = vmatprep.mubr.f32.mxu0 0.0
    %1027 = vmatmul.mubr.f32.gmra.mrb[0].mxu0 %v955
    %v1028 = vpop.f32.mrb[0].mxu0
    %v1029 = vadd.f32 0.0, %v1028
    %v1030 = vpop.f32.mrb[0].mxu0
    %1031 = vdwg.mxu0
    %v1033 = vsel %vm518, %v410, 0
    %v1036 = vsel %vm518, %v411, 0
    %1038 = vmatprep.subr.mxu0 0.0
    %1039 = vmatpush1.msra.mxu0 %v947
    %1040 = vmatprep.subr.mxu0 0.0
    %1041 = vmatpush1.msra.mxu0 %v948
    %1042 = vmatprep.subr.mxu0 0.0
    %1043 = vmatpush1.msra.mxu0 0.0
    %1044 = vmatprep.subr.mxu0 0.0
    %1045 = vmatpush1.msra.mxu0 0.0
    %1046 = vmatprep.subr.mxu0 0.0
    %1047 = vmatpush1.msra.mxu0 0.0
    %1048 = vmatprep.subr.mxu0 0.0
    %1049 = vmatpush1.msra.mxu0 0.0
    %1050 = vmatprep.subr.mxu0 0.0
    %1051 = vmatpush1.msra.mxu0 0.0
    %1052 = vmatprep.subr.mxu0 0.0
    %1053 = vmatpush1.msra.mxu0 0.0
    %1054 = vmatprep.subr.mxu0 0.0
    %1055 = vmatpush1.msra.mxu0 0.0
    %1056 = vmatprep.subr.mxu0 0.0
    %1057 = vmatpush1.msra.mxu0 0.0
    %1058 = vmatprep.subr.mxu0 0.0
    %1059 = vmatpush1.msra.mxu0 0.0
    %1060 = vmatprep.subr.mxu0 0.0
    %1061 = vmatpush1.msra.mxu0 0.0
    %1062 = vmatprep.subr.mxu0 0.0
    %1063 = vmatpush1.msra.mxu0 0.0
    %1064 = vmatprep.subr.mxu0 0.0
    %1065 = vmatpush1.msra.mxu0 0.0
    %1066 = vmatprep.subr.mxu0 0.0
    %1067 = vmatpush1.msra.mxu0 0.0
    %1068 = vmatprep.subr.mxu0 0.0
    %1069 = vmatpush1.msra.mxu0 0.0
    %1070 = vmatprep.subr.mxu0 0.0
    %1071 = vmatpush1.msra.mxu0 0.0
    %1072 = vmatprep.subr.mxu0 0.0
    %1073 = vmatpush1.msra.mxu0 0.0
    %1074 = vmatprep.subr.mxu0 0.0
    %1075 = vmatpush1.msra.mxu0 0.0
    %1076 = vmatprep.subr.mxu0 0.0
    %1077 = vmatpush1.msra.mxu0 0.0
    %1078 = vmatprep.subr.mxu0 0.0
    %1079 = vmatpush1.msra.mxu0 0.0
    %1080 = vmatprep.subr.mxu0 0.0
    %1081 = vmatpush1.msra.mxu0 0.0
    %1082 = vmatprep.subr.mxu0 0.0
    %1083 = vmatpush1.msra.mxu0 0.0
    %1084 = vmatprep.subr.mxu0 0.0
    %1085 = vmatpush1.msra.mxu0 0.0
    %1086 = vmatprep.subr.mxu0 0.0
    %1087 = vmatpush1.msra.mxu0 0.0
    %1088 = vmatprep.subr.mxu0 0.0
    %1089 = vmatpush1.msra.mxu0 0.0
    %1090 = vmatprep.subr.mxu0 0.0
    %1091 = vmatpush1.msra.mxu0 0.0
    %1092 = vmatprep.subr.mxu0 0.0
    %1093 = vmatpush1.msra.mxu0 0.0
    %1094 = vmatprep.subr.mxu0 0.0
    %1095 = vmatpush1.msra.mxu0 0.0
    %1096 = vmatprep.subr.mxu0 0.0
    %1097 = vmatpush1.msra.mxu0 0.0
    %1098 = vmatprep.subr.mxu0 0.0
    %1099 = vmatpush1.msra.mxu0 0.0
    %1100 = vmatprep.subr.mxu0 0.0
    %1101 = vmatpush1.msra.mxu0 0.0
    %1102 = vmatprep.mubr.f32.mxu0 0.0
    %1103 = vmatmul.mubr.f32.gmra.mrb[0].mxu0 %v1033
    %v1104 = vpop.f32.mrb[0].mxu0
    %v1105 = vadd.f32 0.0, %v1104
    %v1106 = vpop.f32.mrb[0].mxu0
    %1107 = vmatprep.mubr.f32.mxu0 0.0
    %1108 = vmatmul.mubr.f32.gmra.mrb[0].mxu0 %v1036
    %v1109 = vpop.f32.mrb[0].mxu0
    %v1110 = vadd.f32 0.0, %v1109
    %v1111 = vpop.f32.mrb[0].mxu0
    %1112 = vdwg.mxu0
    %v1114 = vsel %vm518, %v412, 0
    %v1117 = vsel %vm518, %v413, 0
    %1119 = vmatprep.subr.mxu0 0.0
    %1120 = vmatpush1.msra.mxu0 %v949
    %1121 = vmatprep.subr.mxu0 0.0
    %1122 = vmatpush1.msra.mxu0 %v950
    %1123 = vmatprep.subr.mxu0 0.0
    %1124 = vmatpush1.msra.mxu0 0.0
    %1125 = vmatprep.subr.mxu0 0.0
    %1126 = vmatpush1.msra.mxu0 0.0
    %1127 = vmatprep.subr.mxu0 0.0
    %1128 = vmatpush1.msra.mxu0 0.0
    %1129 = vmatprep.subr.mxu0 0.0
    %1130 = vmatpush1.msra.mxu0 0.0
    %1131 = vmatprep.subr.mxu0 0.0
    %1132 = vmatpush1.msra.mxu0 0.0
    %1133 = vmatprep.subr.mxu0 0.0
    %1134 = vmatpush1.msra.mxu0 0.0
    %1135 = vmatprep.subr.mxu0 0.0
    %1136 = vmatpush1.msra.mxu0 0.0
    %1137 = vmatprep.subr.mxu0 0.0
    %1138 = vmatpush1.msra.mxu0 0.0
    %1139 = vmatprep.subr.mxu0 0.0
    %1140 = vmatpush1.msra.mxu0 0.0
    %1141 = vmatprep.subr.mxu0 0.0
    %1142 = vmatpush1.msra.mxu0 0.0
    %1143 = vmatprep.subr.mxu0 0.0
    %1144 = vmatpush1.msra.mxu0 0.0
    %1145 = vmatprep.subr.mxu0 0.0
    %1146 = vmatpush1.msra.mxu0 0.0
    %1147 = vmatprep.subr.mxu0 0.0
    %1148 = vmatpush1.msra.mxu0 0.0
    %1149 = vmatprep.subr.mxu0 0.0
    %1150 = vmatpush1.msra.mxu0 0.0
    %1151 = vmatprep.subr.mxu0 0.0
    %1152 = vmatpush1.msra.mxu0 0.0
    %1153 = vmatprep.subr.mxu0 0.0
    %1154 = vmatpush1.msra.mxu0 0.0
    %1155 = vmatprep.subr.mxu0 0.0
    %1156 = vmatpush1.msra.mxu0 0.0
    %1157 = vmatprep.subr.mxu0 0.0
    %1158 = vmatpush1.msra.mxu0 0.0
    %1159 = vmatprep.subr.mxu0 0.0
    %1160 = vmatpush1.msra.mxu0 0.0
    %1161 = vmatprep.subr.mxu0 0.0
    %1162 = vmatpush1.msra.mxu0 0.0
    %1163 = vmatprep.subr.mxu0 0.0
    %1164 = vmatpush1.msra.mxu0 0.0
    %1165 = vmatprep.subr.mxu0 0.0
    %1166 = vmatpush1.msra.mxu0 0.0
    %1167 = vmatprep.subr.mxu0 0.0
    %1168 = vmatpush1.msra.mxu0 0.0
    %1169 = vmatprep.subr.mxu0 0.0
    %1170 = vmatpush1.msra.mxu0 0.0
    %1171 = vmatprep.subr.mxu0 0.0
    %1172 = vmatpush1.msra.mxu0 0.0
    %1173 = vmatprep.subr.mxu0 0.0
    %1174 = vmatpush1.msra.mxu0 0.0
    %1175 = vmatprep.subr.mxu0 0.0
    %1176 = vmatpush1.msra.mxu0 0.0
    %1177 = vmatprep.subr.mxu0 0.0
    %1178 = vmatpush1.msra.mxu0 0.0
    %1179 = vmatprep.subr.mxu0 0.0
    %1180 = vmatpush1.msra.mxu0 0.0
    %1181 = vmatprep.subr.mxu0 0.0
    %1182 = vmatpush1.msra.mxu0 0.0
    %1183 = vmatprep.mubr.f32.mxu0 0.0
    %1184 = vmatmul.mubr.f32.gmra.mrb[0].mxu0 %v1114
    %v1185 = vpop.f32.mrb[0].mxu0
    %v1186 = vadd.f32 0.0, %v1185
    %v1187 = vpop.f32.mrb[0].mxu0
    %1188 = vmatprep.mubr.f32.mxu0 0.0
    %1189 = vmatmul.mubr.f32.gmra.mrb[0].mxu0 %v1117
    %v1190 = vpop.f32.mrb[0].mxu0
    %v1191 = vadd.f32 0.0, %v1190
    %v1192 = vpop.f32.mrb[0].mxu0
    %1193 = vdwg.mxu0
    %v1194 = vsub.f32 %v1024, %v1105
    %v1195 = vsub.f32 %v1029, %v1110
    %v1196 = vsub.f32 %v1186, %v1024
    %v1197 = vsub.f32 %v1191, %v1029
    %v1198 = vsub.f32 %v1196, %v1105
    %v1199 = vsub.f32 %v1197, %v1110
    %v1200 = vadd.f32 %v1194, %v1198
    %v1201 = vadd.f32 %v1195, %v1199
    %v1203 = vsel %vm518, %v1194, 0
    %v1206 = vsel %vm518, %v1195, 0
    %1208 = vmatprep.subr.mxu0 0.0
    %1209 = vmatpush1.xpose.msra.mxu0 %v952
    %1210 = vmatprep.subr.mxu0 0.0
    %1211 = vmatpush1.xpose.msra.mxu0 %v955
    %1212 = vmatprep.subr.mxu0 0.0
    %1213 = vmatpush1.xpose.msra.mxu0 0.0
    %1214 = vmatprep.subr.mxu0 0.0
    %1215 = vmatpush1.xpose.msra.mxu0 0.0
    %1216 = vmatprep.subr.mxu0 0.0
    %1217 = vmatpush1.xpose.msra.mxu0 0.0
    %1218 = vmatprep.subr.mxu0 0.0
    %1219 = vmatpush1.xpose.msra.mxu0 0.0
    %1220 = vmatprep.subr.mxu0 0.0
    %1221 = vmatpush1.xpose.msra.mxu0 0.0
    %1222 = vmatprep.subr.mxu0 0.0
    %1223 = vmatpush1.xpose.msra.mxu0 0.0
    %1224 = vmatprep.subr.mxu0 0.0
    %1225 = vmatpush1.xpose.msra.mxu0 0.0
    %1226 = vmatprep.subr.mxu0 0.0
    %1227 = vmatpush1.xpose.msra.mxu0 0.0
    %1228 = vmatprep.subr.mxu0 0.0
    %1229 = vmatpush1.xpose.msra.mxu0 0.0
    %1230 = vmatprep.subr.mxu0 0.0
    %1231 = vmatpush1.xpose.msra.mxu0 0.0
    %1232 = vmatprep.subr.mxu0 0.0
    %1233 = vmatpush1.xpose.msra.mxu0 0.0
    %1234 = vmatprep.subr.mxu0 0.0
    %1235 = vmatpush1.xpose.msra.mxu0 0.0
    %1236 = vmatprep.subr.mxu0 0.0
    %1237 = vmatpush1.xpose.msra.mxu0 0.0
    %1238 = vmatprep.subr.mxu0 0.0
    %1239 = vmatpush1.xpose.msra.mxu0 0.0
    %1240 = vmatprep.subr.mxu0 0.0
    %1241 = vmatpush1.xpose.msra.mxu0 0.0
    %1242 = vmatprep.subr.mxu0 0.0
    %1243 = vmatpush1.xpose.msra.mxu0 0.0
    %1244 = vmatprep.subr.mxu0 0.0
    %1245 = vmatpush1.xpose.msra.mxu0 0.0
    %1246 = vmatprep.subr.mxu0 0.0
    %1247 = vmatpush1.xpose.msra.mxu0 0.0
    %1248 = vmatprep.subr.mxu0 0.0
    %1249 = vmatpush1.xpose.msra.mxu0 0.0
    %1250 = vmatprep.subr.mxu0 0.0
    %1251 = vmatpush1.xpose.msra.mxu0 0.0
    %1252 = vmatprep.subr.mxu0 0.0
    %1253 = vmatpush1.xpose.msra.mxu0 0.0
    %1254 = vmatprep.subr.mxu0 0.0
    %1255 = vmatpush1.xpose.msra.mxu0 0.0
    %1256 = vmatprep.subr.mxu0 0.0
    %1257 = vmatpush1.xpose.msra.mxu0 0.0
    %1258 = vmatprep.subr.mxu0 0.0
    %1259 = vmatpush1.xpose.msra.mxu0 0.0
    %1260 = vmatprep.subr.mxu0 0.0
    %1261 = vmatpush1.xpose.msra.mxu0 0.0
    %1262 = vmatprep.subr.mxu0 0.0
    %1263 = vmatpush1.xpose.msra.mxu0 0.0
    %1264 = vmatprep.subr.mxu0 0.0
    %1265 = vmatpush1.xpose.msra.mxu0 0.0
    %1266 = vmatprep.subr.mxu0 0.0
    %1267 = vmatpush1.xpose.msra.mxu0 0.0
    %1268 = vmatprep.subr.mxu0 0.0
    %1269 = vmatpush1.xpose.msra.mxu0 0.0
    %1270 = vmatprep.subr.mxu0 0.0
    %1271 = vmatpush1.xpose.msra.mxu0 0.0
    %1272 = vmatprep.mubr.f32.mxu0 0.0
    %1273 = vmatmul.mubr.f32.gmra.mrb[0].mxu0 %v1203
    %v1274 = vpop.f32.mrb[0].mxu0
    %v1275 = vadd.f32 0.0, %v1274
    %v1276 = vpop.f32.mrb[0].mxu0
    %1277 = vmatprep.mubr.f32.mxu0 0.0
    %1278 = vmatmul.mubr.f32.gmra.mrb[0].mxu0 %v1206
    %v1279 = vpop.f32.mrb[0].mxu0
    %v1280 = vadd.f32 0.0, %v1279
    %v1281 = vpop.f32.mrb[0].mxu0
    %1282 = vdwg.mxu0
    %v1284 = vsel %vm518, %v1198, 0
    %v1287 = vsel %vm518, %v1199, 0
    %1289 = vmatprep.subr.mxu0 0.0
    %1290 = vmatpush1.xpose.msra.mxu0 %v1033
    %1291 = vmatprep.subr.mxu0 0.0
    %1292 = vmatpush1.xpose.msra.mxu0 %v1036
    %1293 = vmatprep.subr.mxu0 0.0
    %1294 = vmatpush1.xpose.msra.mxu0 0.0
    %1295 = vmatprep.subr.mxu0 0.0
    %1296 = vmatpush1.xpose.msra.mxu0 0.0
    %1297 = vmatprep.subr.mxu0 0.0
    %1298 = vmatpush1.xpose.msra.mxu0 0.0
    %1299 = vmatprep.subr.mxu0 0.0
    %1300 = vmatpush1.xpose.msra.mxu0 0.0
    %1301 = vmatprep.subr.mxu0 0.0
    %1302 = vmatpush1.xpose.msra.mxu0 0.0
    %1303 = vmatprep.subr.mxu0 0.0
    %1304 = vmatpush1.xpose.msra.mxu0 0.0
    %1305 = vmatprep.subr.mxu0 0.0
    %1306 = vmatpush1.xpose.msra.mxu0 0.0
    %1307 = vmatprep.subr.mxu0 0.0
    %1308 = vmatpush1.xpose.msra.mxu0 0.0
    %1309 = vmatprep.subr.mxu0 0.0
    %1310 = vmatpush1.xpose.msra.mxu0 0.0
    %1311 = vmatprep.subr.mxu0 0.0
    %1312 = vmatpush1.xpose.msra.mxu0 0.0
    %1313 = vmatprep.subr.mxu0 0.0
    %1314 = vmatpush1.xpose.msra.mxu0 0.0
    %1315 = vmatprep.subr.mxu0 0.0
    %1316 = vmatpush1.xpose.msra.mxu0 0.0
    %1317 = vmatprep.subr.mxu0 0.0
    %1318 = vmatpush1.xpose.msra.mxu0 0.0
    %1319 = vmatprep.subr.mxu0 0.0
    %1320 = vmatpush1.xpose.msra.mxu0 0.0
    %1321 = vmatprep.subr.mxu0 0.0
    %1322 = vmatpush1.xpose.msra.mxu0 0.0
    %1323 = vmatprep.subr.mxu0 0.0
    %1324 = vmatpush1.xpose.msra.mxu0 0.0
    %1325 = vmatprep.subr.mxu0 0.0
    %1326 = vmatpush1.xpose.msra.mxu0 0.0
    %1327 = vmatprep.subr.mxu0 0.0
    %1328 = vmatpush1.xpose.msra.mxu0 0.0
    %1329 = vmatprep.subr.mxu0 0.0
    %1330 = vmatpush1.xpose.msra.mxu0 0.0
    %1331 = vmatprep.subr.mxu0 0.0
    %1332 = vmatpush1.xpose.msra.mxu0 0.0
    %1333 = vmatprep.subr.mxu0 0.0
    %1334 = vmatpush1.xpose.msra.mxu0 0.0
    %1335 = vmatprep.subr.mxu0 0.0
    %1336 = vmatpush1.xpose.msra.mxu0 0.0
    %1337 = vmatprep.subr.mxu0 0.0
    %1338 = vmatpush1.xpose.msra.mxu0 0.0
    %1339 = vmatprep.subr.mxu0 0.0
    %1340 = vmatpush1.xpose.msra.mxu0 0.0
    %1341 = vmatprep.subr.mxu0 0.0
    %1342 = vmatpush1.xpose.msra.mxu0 0.0
    %1343 = vmatprep.subr.mxu0 0.0
    %1344 = vmatpush1.xpose.msra.mxu0 0.0
    %1345 = vmatprep.subr.mxu0 0.0
    %1346 = vmatpush1.xpose.msra.mxu0 0.0
    %1347 = vmatprep.subr.mxu0 0.0
    %1348 = vmatpush1.xpose.msra.mxu0 0.0
    %1349 = vmatprep.subr.mxu0 0.0
    %1350 = vmatpush1.xpose.msra.mxu0 0.0
    %1351 = vmatprep.subr.mxu0 0.0
    %1352 = vmatpush1.xpose.msra.mxu0 0.0
    %1353 = vmatprep.mubr.f32.mxu0 0.0
    %1354 = vmatmul.mubr.f32.gmra.mrb[0].mxu0 %v1284
    %v1355 = vpop.f32.mrb[0].mxu0
    %v1356 = vadd.f32 0.0, %v1355
    %v1357 = vpop.f32.mrb[0].mxu0
    %1358 = vmatprep.mubr.f32.mxu0 0.0
    %1359 = vmatmul.mubr.f32.gmra.mrb[0].mxu0 %v1287
    %v1360 = vpop.f32.mrb[0].mxu0
    %v1361 = vadd.f32 0.0, %v1360
    %v1362 = vpop.f32.mrb[0].mxu0
    %1363 = vdwg.mxu0
    %v1365 = vsel %vm518, %v1200, 0
    %v1368 = vsel %vm518, %v1201, 0
    %1370 = vmatprep.subr.mxu0 0.0
    %1371 = vmatpush1.xpose.msra.mxu0 %v1114
    %1372 = vmatprep.subr.mxu0 0.0
    %1373 = vmatpush1.xpose.msra.mxu0 %v1117
    %1374 = vmatprep.subr.mxu0 0.0
    %1375 = vmatpush1.xpose.msra.mxu0 0.0
    %1376 = vmatprep.subr.mxu0 0.0
    %1377 = vmatpush1.xpose.msra.mxu0 0.0
    %1378 = vmatprep.subr.mxu0 0.0
    %1379 = vmatpush1.xpose.msra.mxu0 0.0
    %1380 = vmatprep.subr.mxu0 0.0
    %1381 = vmatpush1.xpose.msra.mxu0 0.0
    %1382 = vmatprep.subr.mxu0 0.0
    %1383 = vmatpush1.xpose.msra.mxu0 0.0
    %1384 = vmatprep.subr.mxu0 0.0
    %1385 = vmatpush1.xpose.msra.mxu0 0.0
    %1386 = vmatprep.subr.mxu0 0.0
    %1387 = vmatpush1.xpose.msra.mxu0 0.0
    %1388 = vmatprep.subr.mxu0 0.0
    %1389 = vmatpush1.xpose.msra.mxu0 0.0
    %1390 = vmatprep.subr.mxu0 0.0
    %1391 = vmatpush1.xpose.msra.mxu0 0.0
    %1392 = vmatprep.subr.mxu0 0.0
    %1393 = vmatpush1.xpose.msra.mxu0 0.0
    %1394 = vmatprep.subr.mxu0 0.0
    %1395 = vmatpush1.xpose.msra.mxu0 0.0
    %1396 = vmatprep.subr.mxu0 0.0
    %1397 = vmatpush1.xpose.msra.mxu0 0.0
    %1398 = vmatprep.subr.mxu0 0.0
    %1399 = vmatpush1.xpose.msra.mxu0 0.0
    %1400 = vmatprep.subr.mxu0 0.0
    %1401 = vmatpush1.xpose.msra.mxu0 0.0
    %1402 = vmatprep.subr.mxu0 0.0
    %1403 = vmatpush1.xpose.msra.mxu0 0.0
    %1404 = vmatprep.subr.mxu0 0.0
    %1405 = vmatpush1.xpose.msra.mxu0 0.0
    %1406 = vmatprep.subr.mxu0 0.0
    %1407 = vmatpush1.xpose.msra.mxu0 0.0
    %1408 = vmatprep.subr.mxu0 0.0
    %1409 = vmatpush1.xpose.msra.mxu0 0.0
    %1410 = vmatprep.subr.mxu0 0.0
    %1411 = vmatpush1.xpose.msra.mxu0 0.0
    %1412 = vmatprep.subr.mxu0 0.0
    %1413 = vmatpush1.xpose.msra.mxu0 0.0
    %1414 = vmatprep.subr.mxu0 0.0
    %1415 = vmatpush1.xpose.msra.mxu0 0.0
    %1416 = vmatprep.subr.mxu0 0.0
    %1417 = vmatpush1.xpose.msra.mxu0 0.0
    %1418 = vmatprep.subr.mxu0 0.0
    %1419 = vmatpush1.xpose.msra.mxu0 0.0
    %1420 = vmatprep.subr.mxu0 0.0
    %1421 = vmatpush1.xpose.msra.mxu0 0.0
    %1422 = vmatprep.subr.mxu0 0.0
    %1423 = vmatpush1.xpose.msra.mxu0 0.0
    %1424 = vmatprep.subr.mxu0 0.0
    %1425 = vmatpush1.xpose.msra.mxu0 0.0
    %1426 = vmatprep.subr.mxu0 0.0
    %1427 = vmatpush1.xpose.msra.mxu0 0.0
    %1428 = vmatprep.subr.mxu0 0.0
    %1429 = vmatpush1.xpose.msra.mxu0 0.0
    %1430 = vmatprep.subr.mxu0 0.0
    %1431 = vmatpush1.xpose.msra.mxu0 0.0
    %1432 = vmatprep.subr.mxu0 0.0
    %1433 = vmatpush1.xpose.msra.mxu0 0.0
    %1434 = vmatprep.mubr.f32.mxu0 0.0
    %1435 = vmatmul.mubr.f32.gmra.mrb[0].mxu0 %v1365
    %v1436 = vpop.f32.mrb[0].mxu0
    %v1437 = vadd.f32 0.0, %v1436
    %v1438 = vpop.f32.mrb[0].mxu0
    %1439 = vmatprep.mubr.f32.mxu0 0.0
    %1440 = vmatmul.mubr.f32.gmra.mrb[0].mxu0 %v1368
    %v1441 = vpop.f32.mrb[0].mxu0
    %v1442 = vadd.f32 0.0, %v1441
    %v1443 = vpop.f32.mrb[0].mxu0
    %1444 = vdwg.mxu0
    %v1445 = vsub.f32 %v1275, %v1356
    %v1446 = vsub.f32 %v1280, %v1361
    %v1447 = vsub.f32 %v1437, %v1275
    %v1448 = vsub.f32 %v1442, %v1280
    %v1449 = vsub.f32 %v1447, %v1356
    %v1450 = vsub.f32 %v1448, %v1361
    %v1451 = vmul.f32 %v1445, %v1445
    %v1452 = vmul.f32 %v1446, %v1446
    %v1453 = vmul.f32 %v1449, %v1449
    %v1454 = vmul.f32 %v1450, %v1450
    %v1455 = vadd.f32 %v1451, %v1453
    %v1456 = vadd.f32 %v1452, %v1454
    %1457 = vst.msk [vmem:[#allocation6] sm:$0xff] %vm518, %v1455
    %1458 = vst.msk [vmem:[#allocation6 + $0x8] sm:$0xff] %vm518, %v1456
    %v1459 = vld [vmem:[%s8] sm:$0xff]
    %v1460 = vld [vmem:[%s8 + $0x8] sm:$0xff]
    %v1461 = vrot.slane %v405, 1
    %s1462 = vtos %v1461
    %v1463 = vstv %s1462
    %v1465 = vmul.f32 %v1463, %v1459
    %v1466 = vmul.f32 %v1463, %v1460
    %v1467 = vld [vmem:[%s422] sm:$0xff]
    %v1468 = vld [vmem:[%s422 + $0x8] sm:$0xff]
    %1469 = vrot.lane.b32.xlu0 %v1461, 127
    %v1470 = vpop.permute.xlu0 %1469
    %s1471 = vtos %v1470
    %v1472 = vstv %s1471
    %v1474 = vmul.f32 %v1472, %v1467
    %v1475 = vmul.f32 %v1472, %v1468
    %v1476 = vadd.f32 %v1465, %v1474
    %v1477 = vadd.f32 %v1466, %v1475
    %v1478 = vld [vmem:[%s434] sm:$0xff]
    %v1479 = vld [vmem:[%s434 + $0x8] sm:$0xff]
    %1480 = vrot.lane.b32.xlu0 %v1461, 126
    %v1481 = vpop.permute.xlu0 %1480
    %s1482 = vtos %v1481
    %v1483 = vstv %s1482
    %v1485 = vmul.f32 %v1483, %v1478
    %v1486 = vmul.f32 %v1483, %v1479
    %v1487 = vadd.f32 %v1476, %v1485
    %v1488 = vadd.f32 %v1477, %v1486
    %v1489 = vld [vmem:[%s446] sm:$0xff]
    %v1490 = vld [vmem:[%s446 + $0x8] sm:$0xff]
    %1491 = vrot.lane.b32.xlu0 %v1461, 125
    %v1492 = vpop.permute.xlu0 %1491
    %s1493 = vtos %v1492
    %v1494 = vstv %s1493
    %v1496 = vmul.f32 %v1494, %v1489
    %v1497 = vmul.f32 %v1494, %v1490
    %v1498 = vadd.f32 %v1487, %v1496
    %v1499 = vadd.f32 %v1488, %v1497
    %v1500 = vld [vmem:[%s458] sm:$0xff]
    %v1501 = vld [vmem:[%s458 + $0x8] sm:$0xff]
    %1502 = vrot.lane.b32.xlu0 %v1461, 124
    %v1503 = vpop.permute.xlu0 %1502
    %s1504 = vtos %v1503
    %v1505 = vstv %s1504
    %v1507 = vmul.f32 %v1505, %v1500
    %v1508 = vmul.f32 %v1505, %v1501
    %v1509 = vadd.f32 %v1498, %v1507
    %v1510 = vadd.f32 %v1499, %v1508
    %v1511 = vld [vmem:[%s470] sm:$0xff]
    %v1512 = vld [vmem:[%s470 + $0x8] sm:$0xff]
    %1513 = vrot.lane.b32.xlu0 %v1461, 123
    %v1514 = vpop.permute.xlu0 %1513
    %s1515 = vtos %v1514
    %v1516 = vstv %s1515
    %v1518 = vmul.f32 %v1516, %v1511
    %v1519 = vmul.f32 %v1516, %v1512
    %v1520 = vadd.f32 %v1509, %v1518
    %v1521 = vadd.f32 %v1510, %v1519
    %v1522 = vld [vmem:[%s482] sm:$0xff]
    %v1523 = vld [vmem:[%s482 + $0x8] sm:$0xff]
    %1524 = vrot.lane.b32.xlu0 %v1461, 122
    %v1525 = vpop.permute.xlu0 %1524
    %s1526 = vtos %v1525
    %v1527 = vstv %s1526
    %v1529 = vmul.f32 %v1527, %v1522
    %v1530 = vmul.f32 %v1527, %v1523
    %v1531 = vadd.f32 %v1520, %v1529
    %v1532 = vadd.f32 %v1521, %v1530
    %v1533 = vld [vmem:[%s494] sm:$0xff]
    %v1534 = vld [vmem:[%s494 + $0x8] sm:$0xff]
    %1535 = vrot.lane.b32.xlu0 %v1461, 121
    %v1536 = vpop.permute.xlu0 %1535
    %s1537 = vtos %v1536
    %v1538 = vstv %s1537
    %v1540 = vmul.f32 %v1538, %v1533
    %v1541 = vmul.f32 %v1538, %v1534
    %v1542 = vadd.f32 %v1531, %v1540
    %v1543 = vadd.f32 %v1532, %v1541
    %v1544 = vld [vmem:[%s506] sm:$0xff]
    %v1545 = vld [vmem:[%s506 + $0x8] sm:$0xff]
    %1546 = vrot.lane.b32.xlu0 %v1461, 120
    %v1547 = vpop.permute.xlu0 %1546
    %s1548 = vtos %v1547
    %v1549 = vstv %s1548
    %v1551 = vmul.f32 %v1549, %v1544
    %v1552 = vmul.f32 %v1549, %v1545
    %v1553 = vadd.f32 %v1542, %v1551
    %v1554 = vadd.f32 %v1543, %v1552
    %s1555 = scalar_lea.vmem [#allocation4], 16
    %1556 = vst.msk [vmem:[%s1555] sm:$0xff] %vm518, %v1553
    %1557 = vst.msk [vmem:[%s1555 + $0x8] sm:$0xff] %vm518, %v1554
    %v1558 = vmul.f32 %v1553, 6.2831855
    %v1559 = vmul.f32 %v1554, 6.2831855
    %v1560 = vand.u32 2147483647, %v1558
    %vm1561 = vcmp.le.f32.partialorder %v1560, 0.7853982
    %vm1562 = vcmp.lt.s32.totalorder %v1558, 0
    %v1563 = vand.u32 %v1558, 2139095040
    %v1564 = vshrl.u32 %v1563, 23
    %v1565 = vsub.s32 %v1564, 127
    %v1566 = vand.u32 2147483647, %v1558
    %v1567 = vand.u32 %v1566, 8388607
    %v1568 = vor.u32 %v1567, 8388608
    %v1569 = vsub.s32 0, %v1568
    %v1570 = vadd.s32 %v1565, 1
    %vm1571 = vcmp.gt.s32.totalorder %v1570, 0
    %v1572 = vsel %vm1571, %v1570, 0
    %v1573 = vshrl.u32 %v1572, 5
    %v1574 = vand.u32 %v1572, 31
    %v1575 = vsub.s32 32, %v1574
    %v1576 = vshrl.u32 683565275, %v1575
    %v1577 = vshll.u32 683565275, %v1574
    %v1578 = vshrl.u32 2475754826, %v1575
    %v1579 = vor.u32 %v1577, %v1578
    %v1580 = vshll.u32 2475754826, %v1574
    %v1581 = vshrl.u32 2131351028, %v1575
    %v1582 = vor.u32 %v1580, %v1581
    %v1583 = vshll.u32 2131351028, %v1574
    %v1584 = vshrl.u32 2102212464, %v1575
    %v1585 = vor.u32 %v1583, %v1584
    %v1586 = vshll.u32 2102212464, %v1574
    %v1587 = vshrl.u32 920167782, %v1575
    %v1588 = vor.u32 %v1586, %v1587
    %v1589 = vshll.u32 920167782, %v1574
    %v1590 = vshrl.u32 1326507024, %v1575
    %v1591 = vor.u32 %v1589, %v1590
    %vm1592 = vcmp.lt.s32.totalorder %v1573, 1
    %vm1593 = vcmp.lt.s32.totalorder %v1573, 2
    %vm1594 = vcmp.lt.s32.totalorder %v1573, 3
    %vm1595 = vcmp.lt.s32.totalorder %v1573, 4
    %v1596 = vsel %vm1592, %v1576, %v1579
    %v1597 = vsel %vm1595, %v1585, 2102212464
    %v1598 = vsel %vm1594, %v1582, %v1597
    %v1599 = vsel %vm1593, %v1596, %v1598
    %v1600 = vsel %vm1592, %v1579, %v1582
    %v1601 = vsel %vm1595, %v1588, 920167782
    %v1602 = vsel %vm1594, %v1585, %v1601
    %v1603 = vsel %vm1593, %v1600, %v1602
    %v1604 = vsel %vm1592, %v1582, %v1585
    %v1605 = vsel %vm1595, %v1591, 1326507024
    %v1606 = vsel %vm1594, %v1588, %v1605
    %v1607 = vsel %vm1593, %v1604, %v1606
    %v1608 = vshll.u32 %v1568, 8
    %v1609 = vmul.u32.u64.compose %v1608, %v1607
    %v1610 = vextract.low.u32 %v1609
    %v1611 = vextract.high.u32 %v1609
    %v1612 = vmul.u32.u64.compose %v1608, %v1603
    %v1613 = vextract.low.u32 %v1612
    %v1614 = vextract.high.u32 %v1612
    %v1615 = vmul.u32 %v1608, %v1599
    %v1616 = vadd.s32 %v1611, %v1613
    %vm1617 = vc.u32 %v1611, %v1613
    %v1618 = vadd.s32 %v1614, 1
    %v1619 = vsel %vm1617, %v1618, %v1614
    %v1620 = vadd.s32 %v1615, %v1619
    %v1621 = vadd.s32 %v1620, 536870912
    %v1622 = vshrl.u32 %v1621, 30
    %v1623 = vshll.u32 %v1622, 30
    %v1624 = vsub.s32 %v1620, %v1623
    %vm1625 = vcmp.lt.s32.totalorder %v1624, 0
    %v1626 = vsub.s32 0, %v1624
    %v1627 = vsel %vm1625, %v1626, %v1624
    %v1628 = vclz %v1627
    %v1629 = vsub.s32 %v1628, 2
    %vm1630 = vcmp.gt.s32.totalorder 0, %v1629
    %v1631 = vsel %vm1630, 0, %v1629
    %v1632 = vsub.s32 32, %v1631
    %v1633 = vshll.u32 %v1624, %v1631
    %v1634 = vshrl.u32 %v1616, %v1632
    %v1635 = vor.u32 %v1633, %v1634
    %v1636 = vsub.s32 4294967266, %v1631
    %v1637 = vadd.s32 %v1636, 127
    %v1638 = vshll.u32 %v1637, 23
    %v1639 = vor.u32 4788187, %v1638
    %v1640 = vand.u32 2147483647, %v1639
    %v1642 = vcvt.s32.f32 %v1635
    %v1643 = vmul.f32 %v1642, %v1640
    %v1644 = vxor.u32 %v1643, 2147483648
    %v1645 = vsel %vm1562, %v1644, %v1643
    %v1646 = vsub.s32 4, %v1622
    %v1647 = vsel %vm1562, %v1646, %v1622
    %v1648 = vsel %vm1561, %v1558, %v1645
    %v1649 = vsel %vm1561, 0, %v1647
    %v1650 = vcosq.f32.pop %v1648
    %v1651 = vsinq.f32.pop %v1648
    %vm1652 = vweird.f32 %v1558
    %v1653 = vand.u32 %v1649, 3
    %vm1654 = vcmp.lt.s32.totalorder %v1653, 2
    %vm1655 = vcmp.eq.s32.totalorder %v1653, 0
    %v1656 = vxor.u32 %v1651, 2147483648
    %v1657 = vsel %vm1655, %v1650, %v1656
    %vm1658 = vcmp.eq.s32.totalorder %v1653, 2
    %v1659 = vxor.u32 %v1650, 2147483648
    %v1660 = vsel %vm1658, %v1659, %v1651
    %v1661 = vsel %vm1654, %v1657, %v1660
    %v1662 = vsel %vm1652, nan, %v1661
    %v1663 = vand.u32 2147483647, %v1559
    %vm1664 = vcmp.le.f32.partialorder %v1663, 0.7853982
    %vm1665 = vcmp.lt.s32.totalorder %v1559, 0
    %v1666 = vand.u32 %v1559, 2139095040
    %v1667 = vshrl.u32 %v1666, 23
    %v1668 = vsub.s32 %v1667, 127
    %v1669 = vand.u32 2147483647, %v1559
    %v1670 = vand.u32 %v1669, 8388607
    %v1671 = vor.u32 %v1670, 8388608
    %v1672 = vsub.s32 0, %v1671
    %v1673 = vadd.s32 %v1668, 1
    %vm1674 = vcmp.gt.s32.totalorder %v1673, 0
    %v1675 = vsel %vm1674, %v1673, 0
    %v1676 = vshrl.u32 %v1675, 5
    %v1677 = vand.u32 %v1675, 31
    %v1678 = vsub.s32 32, %v1677
    %v1679 = vshrl.u32 683565275, %v1678
    %v1680 = vshll.u32 683565275, %v1677
    %v1681 = vshrl.u32 2475754826, %v1678
    %v1682 = vor.u32 %v1680, %v1681
    %v1683 = vshll.u32 2475754826, %v1677
    %v1684 = vshrl.u32 2131351028, %v1678
    %v1685 = vor.u32 %v1683, %v1684
    %v1686 = vshll.u32 2131351028, %v1677
    %v1687 = vshrl.u32 2102212464, %v1678
    %v1688 = vor.u32 %v1686, %v1687
    %v1689 = vshll.u32 2102212464, %v1677
    %v1690 = vshrl.u32 920167782, %v1678
    %v1691 = vor.u32 %v1689, %v1690
    %v1692 = vshll.u32 920167782, %v1677
    %v1693 = vshrl.u32 1326507024, %v1678
    %v1694 = vor.u32 %v1692, %v1693
    %vm1695 = vcmp.lt.s32.totalorder %v1676, 1
    %vm1696 = vcmp.lt.s32.totalorder %v1676, 2
    %vm1697 = vcmp.lt.s32.totalorder %v1676, 3
    %vm1698 = vcmp.lt.s32.totalorder %v1676, 4
    %v1699 = vsel %vm1695, %v1679, %v1682
    %v1700 = vsel %vm1698, %v1688, 2102212464
    %v1701 = vsel %vm1697, %v1685, %v1700
    %v1702 = vsel %vm1696, %v1699, %v1701
    %v1703 = vsel %vm1695, %v1682, %v1685
    %v1704 = vsel %vm1698, %v1691, 920167782
    %v1705 = vsel %vm1697, %v1688, %v1704
    %v1706 = vsel %vm1696, %v1703, %v1705
    %v1707 = vsel %vm1695, %v1685, %v1688
    %v1708 = vsel %vm1698, %v1694, 1326507024
    %v1709 = vsel %vm1697, %v1691, %v1708
    %v1710 = vsel %vm1696, %v1707, %v1709
    %v1711 = vshll.u32 %v1671, 8
    %v1712 = vmul.u32.u64.compose %v1711, %v1710
    %v1713 = vextract.low.u32 %v1712
    %v1714 = vextract.high.u32 %v1712
    %v1715 = vmul.u32.u64.compose %v1711, %v1706
    %v1716 = vextract.low.u32 %v1715
    %v1717 = vextract.high.u32 %v1715
    %v1718 = vmul.u32 %v1711, %v1702
    %v1719 = vadd.s32 %v1714, %v1716
    %vm1720 = vc.u32 %v1714, %v1716
    %v1721 = vadd.s32 %v1717, 1
    %v1722 = vsel %vm1720, %v1721, %v1717
    %v1723 = vadd.s32 %v1718, %v1722
    %v1724 = vadd.s32 %v1723, 536870912
    %v1725 = vshrl.u32 %v1724, 30
    %v1726 = vshll.u32 %v1725, 30
    %v1727 = vsub.s32 %v1723, %v1726
    %vm1728 = vcmp.lt.s32.totalorder %v1727, 0
    %v1729 = vsub.s32 0, %v1727
    %v1730 = vsel %vm1728, %v1729, %v1727
    %v1731 = vclz %v1730
    %v1732 = vsub.s32 %v1731, 2
    %vm1733 = vcmp.gt.s32.totalorder 0, %v1732
    %v1734 = vsel %vm1733, 0, %v1732
    %v1735 = vsub.s32 32, %v1734
    %v1736 = vshll.u32 %v1727, %v1734
    %v1737 = vshrl.u32 %v1719, %v1735
    %v1738 = vor.u32 %v1736, %v1737
    %v1739 = vsub.s32 4294967266, %v1734
    %v1740 = vadd.s32 %v1739, 127
    %v1741 = vshll.u32 %v1740, 23
    %v1742 = vor.u32 4788187, %v1741
    %v1743 = vand.u32 2147483647, %v1742
    %v1745 = vcvt.s32.f32 %v1738
    %v1746 = vmul.f32 %v1745, %v1743
    %v1747 = vxor.u32 %v1746, 2147483648
    %v1748 = vsel %vm1665, %v1747, %v1746
    %v1749 = vsub.s32 4, %v1725
    %v1750 = vsel %vm1665, %v1749, %v1725
    %v1751 = vsel %vm1664, %v1559, %v1748
    %v1752 = vsel %vm1664, 0, %v1750
    %v1753 = vcosq.f32.pop %v1751
    %v1754 = vsinq.f32.pop %v1751
    %vm1755 = vweird.f32 %v1559
    %v1756 = vand.u32 %v1752, 3
    %vm1757 = vcmp.lt.s32.totalorder %v1756, 2
    %vm1758 = vcmp.eq.s32.totalorder %v1756, 0
    %v1759 = vxor.u32 %v1754, 2147483648
    %v1760 = vsel %vm1758, %v1753, %v1759
    %vm1761 = vcmp.eq.s32.totalorder %v1756, 2
    %v1762 = vxor.u32 %v1753, 2147483648
    %v1763 = vsel %vm1761, %v1762, %v1754
    %v1764 = vsel %vm1757, %v1760, %v1763
    %v1765 = vsel %vm1755, nan, %v1764
    %v1766 = vand.u32 2147483647, %v1558
    %vm1767 = vcmp.le.f32.partialorder %v1766, 0.7853982
    %vm1768 = vcmp.lt.s32.totalorder %v1558, 0
    %v1769 = vand.u32 %v1558, 2139095040
    %v1770 = vshrl.u32 %v1769, 23
    %v1771 = vsub.s32 %v1770, 127
    %v1772 = vand.u32 2147483647, %v1558
    %v1773 = vand.u32 %v1772, 8388607
    %v1774 = vor.u32 %v1773, 8388608
    %v1775 = vsub.s32 0, %v1774
    %v1776 = vadd.s32 %v1771, 1
    %vm1777 = vcmp.gt.s32.totalorder %v1776, 0
    %v1778 = vsel %vm1777, %v1776, 0
    %v1779 = vshrl.u32 %v1778, 5
    %v1780 = vand.u32 %v1778, 31
    %v1781 = vsub.s32 32, %v1780
    %v1782 = vshrl.u32 683565275, %v1781
    %v1783 = vshll.u32 683565275, %v1780
    %v1784 = vshrl.u32 2475754826, %v1781
    %v1785 = vor.u32 %v1783, %v1784
    %v1786 = vshll.u32 2475754826, %v1780
    %v1787 = vshrl.u32 2131351028, %v1781
    %v1788 = vor.u32 %v1786, %v1787
    %v1789 = vshll.u32 2131351028, %v1780
    %v1790 = vshrl.u32 2102212464, %v1781
    %v1791 = vor.u32 %v1789, %v1790
    %v1792 = vshll.u32 2102212464, %v1780
    %v1793 = vshrl.u32 920167782, %v1781
    %v1794 = vor.u32 %v1792, %v1793
    %v1795 = vshll.u32 920167782, %v1780
    %v1796 = vshrl.u32 1326507024, %v1781
    %v1797 = vor.u32 %v1795, %v1796
    %vm1798 = vcmp.lt.s32.totalorder %v1779, 1
    %vm1799 = vcmp.lt.s32.totalorder %v1779, 2
    %vm1800 = vcmp.lt.s32.totalorder %v1779, 3
    %vm1801 = vcmp.lt.s32.totalorder %v1779, 4
    %v1802 = vsel %vm1798, %v1782, %v1785
    %v1803 = vsel %vm1801, %v1791, 2102212464
    %v1804 = vsel %vm1800, %v1788, %v1803
    %v1805 = vsel %vm1799, %v1802, %v1804
    %v1806 = vsel %vm1798, %v1785, %v1788
    %v1807 = vsel %vm1801, %v1794, 920167782
    %v1808 = vsel %vm1800, %v1791, %v1807
    %v1809 = vsel %vm1799, %v1806, %v1808
    %v1810 = vsel %vm1798, %v1788, %v1791
    %v1811 = vsel %vm1801, %v1797, 1326507024
    %v1812 = vsel %vm1800, %v1794, %v1811
    %v1813 = vsel %vm1799, %v1810, %v1812
    %v1814 = vshll.u32 %v1774, 8
    %v1815 = vmul.u32.u64.compose %v1814, %v1813
    %v1816 = vextract.low.u32 %v1815
    %v1817 = vextract.high.u32 %v1815
    %v1818 = vmul.u32.u64.compose %v1814, %v1809
    %v1819 = vextract.low.u32 %v1818
    %v1820 = vextract.high.u32 %v1818
    %v1821 = vmul.u32 %v1814, %v1805
    %v1822 = vadd.s32 %v1817, %v1819
    %vm1823 = vc.u32 %v1817, %v1819
    %v1824 = vadd.s32 %v1820, 1
    %v1825 = vsel %vm1823, %v1824, %v1820
    %v1826 = vadd.s32 %v1821, %v1825
    %v1827 = vadd.s32 %v1826, 536870912
    %v1828 = vshrl.u32 %v1827, 30
    %v1829 = vshll.u32 %v1828, 30
    %v1830 = vsub.s32 %v1826, %v1829
    %vm1831 = vcmp.lt.s32.totalorder %v1830, 0
    %v1832 = vsub.s32 0, %v1830
    %v1833 = vsel %vm1831, %v1832, %v1830
    %v1834 = vclz %v1833
    %v1835 = vsub.s32 %v1834, 2
    %vm1836 = vcmp.gt.s32.totalorder 0, %v1835
    %v1837 = vsel %vm1836, 0, %v1835
    %v1838 = vsub.s32 32, %v1837
    %v1839 = vshll.u32 %v1830, %v1837
    %v1840 = vshrl.u32 %v1822, %v1838
    %v1841 = vor.u32 %v1839, %v1840
    %v1842 = vsub.s32 4294967266, %v1837
    %v1843 = vadd.s32 %v1842, 127
    %v1844 = vshll.u32 %v1843, 23
    %v1845 = vor.u32 4788187, %v1844
    %v1846 = vand.u32 2147483647, %v1845
    %v1848 = vcvt.s32.f32 %v1841
    %v1849 = vmul.f32 %v1848, %v1846
    %v1850 = vxor.u32 %v1849, 2147483648
    %v1851 = vsel %vm1768, %v1850, %v1849
    %v1852 = vsub.s32 4, %v1828
    %v1853 = vsel %vm1768, %v1852, %v1828
    %v1854 = vsel %vm1767, %v1558, %v1851
    %v1855 = vsel %vm1767, 0, %v1853
    %v1856 = vcosq.f32.pop %v1854
    %v1857 = vsinq.f32.pop %v1854
    %vm1858 = vweird.f32 %v1558
    %v1859 = vadd.s32 %v1855, 3
    %v1860 = vand.u32 %v1859, 3
    %vm1861 = vcmp.lt.s32.totalorder %v1860, 2
    %vm1862 = vcmp.eq.s32.totalorder %v1860, 0
    %v1863 = vxor.u32 %v1857, 2147483648
    %v1864 = vsel %vm1862, %v1856, %v1863
    %vm1865 = vcmp.eq.s32.totalorder %v1860, 2
    %v1866 = vxor.u32 %v1856, 2147483648
    %v1867 = vsel %vm1865, %v1866, %v1857
    %v1868 = vsel %vm1861, %v1864, %v1867
    %v1869 = vsel %vm1858, nan, %v1868
    %v1870 = vand.u32 2147483647, %v1559
    %vm1871 = vcmp.le.f32.partialorder %v1870, 0.7853982
    %vm1872 = vcmp.lt.s32.totalorder %v1559, 0
    %v1873 = vand.u32 %v1559, 2139095040
    %v1874 = vshrl.u32 %v1873, 23
    %v1875 = vsub.s32 %v1874, 127
    %v1876 = vand.u32 2147483647, %v1559
    %v1877 = vand.u32 %v1876, 8388607
    %v1878 = vor.u32 %v1877, 8388608
    %v1879 = vsub.s32 0, %v1878
    %v1880 = vadd.s32 %v1875, 1
    %vm1881 = vcmp.gt.s32.totalorder %v1880, 0
    %v1882 = vsel %vm1881, %v1880, 0
    %v1883 = vshrl.u32 %v1882, 5
    %v1884 = vand.u32 %v1882, 31
    %v1885 = vsub.s32 32, %v1884
    %v1886 = vshrl.u32 683565275, %v1885
    %v1887 = vshll.u32 683565275, %v1884
    %v1888 = vshrl.u32 2475754826, %v1885
    %v1889 = vor.u32 %v1887, %v1888
    %v1890 = vshll.u32 2475754826, %v1884
    %v1891 = vshrl.u32 2131351028, %v1885
    %v1892 = vor.u32 %v1890, %v1891
    %v1893 = vshll.u32 2131351028, %v1884
    %v1894 = vshrl.u32 2102212464, %v1885
    %v1895 = vor.u32 %v1893, %v1894
    %v1896 = vshll.u32 2102212464, %v1884
    %v1897 = vshrl.u32 920167782, %v1885
    %v1898 = vor.u32 %v1896, %v1897
    %v1899 = vshll.u32 920167782, %v1884
    %v1900 = vshrl.u32 1326507024, %v1885
    %v1901 = vor.u32 %v1899, %v1900
    %vm1902 = vcmp.lt.s32.totalorder %v1883, 1
    %vm1903 = vcmp.lt.s32.totalorder %v1883, 2
    %vm1904 = vcmp.lt.s32.totalorder %v1883, 3
    %vm1905 = vcmp.lt.s32.totalorder %v1883, 4
    %v1906 = vsel %vm1902, %v1886, %v1889
    %v1907 = vsel %vm1905, %v1895, 2102212464
    %v1908 = vsel %vm1904, %v1892, %v1907
    %v1909 = vsel %vm1903, %v1906, %v1908
    %v1910 = vsel %vm1902, %v1889, %v1892
    %v1911 = vsel %vm1905, %v1898, 920167782
    %v1912 = vsel %vm1904, %v1895, %v1911
    %v1913 = vsel %vm1903, %v1910, %v1912
    %v1914 = vsel %vm1902, %v1892, %v1895
    %v1915 = vsel %vm1905, %v1901, 1326507024
    %v1916 = vsel %vm1904, %v1898, %v1915
    %v1917 = vsel %vm1903, %v1914, %v1916
    %v1918 = vshll.u32 %v1878, 8
    %v1919 = vmul.u32.u64.compose %v1918, %v1917
    %v1920 = vextract.low.u32 %v1919
    %v1921 = vextract.high.u32 %v1919
    %v1922 = vmul.u32.u64.compose %v1918, %v1913
    %v1923 = vextract.low.u32 %v1922
    %v1924 = vextract.high.u32 %v1922
    %v1925 = vmul.u32 %v1918, %v1909
    %v1926 = vadd.s32 %v1921, %v1923
    %vm1927 = vc.u32 %v1921, %v1923
    %v1928 = vadd.s32 %v1924, 1
    %v1929 = vsel %vm1927, %v1928, %v1924
    %v1930 = vadd.s32 %v1925, %v1929
    %v1931 = vadd.s32 %v1930, 536870912
    %v1932 = vshrl.u32 %v1931, 30
    %v1933 = vshll.u32 %v1932, 30
    %v1934 = vsub.s32 %v1930, %v1933
    %vm1935 = vcmp.lt.s32.totalorder %v1934, 0
    %v1936 = vsub.s32 0, %v1934
    %v1937 = vsel %vm1935, %v1936, %v1934
    %v1938 = vclz %v1937
    %v1939 = vsub.s32 %v1938, 2
    %vm1940 = vcmp.gt.s32.totalorder 0, %v1939
    %v1941 = vsel %vm1940, 0, %v1939
    %v1942 = vsub.s32 32, %v1941
    %v1943 = vshll.u32 %v1934, %v1941
    %v1944 = vshrl.u32 %v1926, %v1942
    %v1945 = vor.u32 %v1943, %v1944
    %v1946 = vsub.s32 4294967266, %v1941
    %v1947 = vadd.s32 %v1946, 127
    %v1948 = vshll.u32 %v1947, 23
    %v1949 = vor.u32 4788187, %v1948
    %v1950 = vand.u32 2147483647, %v1949
    %v1952 = vcvt.s32.f32 %v1945
    %v1953 = vmul.f32 %v1952, %v1950
    %v1954 = vxor.u32 %v1953, 2147483648
    %v1955 = vsel %vm1872, %v1954, %v1953
    %v1956 = vsub.s32 4, %v1932
    %v1957 = vsel %vm1872, %v1956, %v1932
    %v1958 = vsel %vm1871, %v1559, %v1955
    %v1959 = vsel %vm1871, 0, %v1957
    %v1960 = vcosq.f32.pop %v1958
    %v1961 = vsinq.f32.pop %v1958
    %vm1962 = vweird.f32 %v1559
    %v1963 = vadd.s32 %v1959, 3
    %v1964 = vand.u32 %v1963, 3
    %vm1965 = vcmp.lt.s32.totalorder %v1964, 2
    %vm1966 = vcmp.eq.s32.totalorder %v1964, 0
    %v1967 = vxor.u32 %v1961, 2147483648
    %v1968 = vsel %vm1966, %v1960, %v1967
    %vm1969 = vcmp.eq.s32.totalorder %v1964, 2
    %v1970 = vxor.u32 %v1960, 2147483648
    %v1971 = vsel %vm1969, %v1970, %v1961
    %v1972 = vsel %vm1965, %v1968, %v1971
    %v1973 = vsel %vm1962, nan, %v1972
    %v1974 = vsub.f32 0.0, %v1869
    %v1975 = vsub.f32 0.0, %v1973
    %vm1976 = vcmp.eq.f32.partialorder %v1662, 1.0
    %vm1977 = vcmp.eq.f32.partialorder %v1765, 1.0
    %vm1978 = vcmp.eq.f32.partialorder %v1974, 0.0
    %vm1979 = vcmp.eq.f32.partialorder %v1975, 0.0
    %vm1980 = vmand %vm1976, %vm1978
    %vm1981 = vmand %vm1977, %vm1979
    %v1982 = vsel %vm1980, 0.0, %v1662
    %v1983 = vsel %vm1981, 0.0, %v1765
    %v1984 = vsel %vm1980, 0.0, %v1974
    %v1985 = vsel %vm1981, 0.0, %v1975
    %v1986 = vadd.f32 %v1982, %v1984
    %v1987 = vadd.f32 %v1983, %v1985
    %1988 = vmatprep.subr.mxu0 0.0
    %1989 = vmatpush1.msra.mxu0 %v1982
    %1990 = vmatprep.subr.mxu0 0.0
    %1991 = vmatpush1.msra.mxu0 %v1983
    %1992 = vmatprep.subr.mxu0 0.0
    %1993 = vmatpush1.msra.mxu0 0.0
    %1994 = vmatprep.subr.mxu0 0.0
    %1995 = vmatpush1.msra.mxu0 0.0
    %1996 = vmatprep.subr.mxu0 0.0
    %1997 = vmatpush1.msra.mxu0 0.0
    %1998 = vmatprep.subr.mxu0 0.0
    %1999 = vmatpush1.msra.mxu0 0.0
    %2000 = vmatprep.subr.mxu0 0.0
    %2001 = vmatpush1.msra.mxu0 0.0
    %2002 = vmatprep.subr.mxu0 0.0
    %2003 = vmatpush1.msra.mxu0 0.0
    %2004 = vmatprep.subr.mxu0 0.0
    %2005 = vmatpush1.msra.mxu0 0.0
    %2006 = vmatprep.subr.mxu0 0.0
    %2007 = vmatpush1.msra.mxu0 0.0
    %2008 = vmatprep.subr.mxu0 0.0
    %2009 = vmatpush1.msra.mxu0 0.0
    %2010 = vmatprep.subr.mxu0 0.0
    %2011 = vmatpush1.msra.mxu0 0.0
    %2012 = vmatprep.subr.mxu0 0.0
    %2013 = vmatpush1.msra.mxu0 0.0
    %2014 = vmatprep.subr.mxu0 0.0
    %2015 = vmatpush1.msra.mxu0 0.0
    %2016 = vmatprep.subr.mxu0 0.0
    %2017 = vmatpush1.msra.mxu0 0.0
    %2018 = vmatprep.subr.mxu0 0.0
    %2019 = vmatpush1.msra.mxu0 0.0
    %2020 = vmatprep.subr.mxu0 0.0
    %2021 = vmatpush1.msra.mxu0 0.0
    %2022 = vmatprep.subr.mxu0 0.0
    %2023 = vmatpush1.msra.mxu0 0.0
    %2024 = vmatprep.subr.mxu0 0.0
    %2025 = vmatpush1.msra.mxu0 0.0
    %2026 = vmatprep.subr.mxu0 0.0
    %2027 = vmatpush1.msra.mxu0 0.0
    %2028 = vmatprep.subr.mxu0 0.0
    %2029 = vmatpush1.msra.mxu0 0.0
    %2030 = vmatprep.subr.mxu0 0.0
    %2031 = vmatpush1.msra.mxu0 0.0
    %2032 = vmatprep.subr.mxu0 0.0
    %2033 = vmatpush1.msra.mxu0 0.0
    %2034 = vmatprep.subr.mxu0 0.0
    %2035 = vmatpush1.msra.mxu0 0.0
    %2036 = vmatprep.subr.mxu0 0.0
    %2037 = vmatpush1.msra.mxu0 0.0
    %2038 = vmatprep.subr.mxu0 0.0
    %2039 = vmatpush1.msra.mxu0 0.0
    %2040 = vmatprep.subr.mxu0 0.0
    %2041 = vmatpush1.msra.mxu0 0.0
    %2042 = vmatprep.subr.mxu0 0.0
    %2043 = vmatpush1.msra.mxu0 0.0
    %2044 = vmatprep.subr.mxu0 0.0
    %2045 = vmatpush1.msra.mxu0 0.0
    %2046 = vmatprep.subr.mxu0 0.0
    %2047 = vmatpush1.msra.mxu0 0.0
    %2048 = vmatprep.subr.mxu0 0.0
    %2049 = vmatpush1.msra.mxu0 0.0
    %2050 = vmatprep.subr.mxu0 0.0
    %2051 = vmatpush1.msra.mxu0 0.0
    %2052 = vmatprep.mubr.f32.mxu0 0.0
    %2053 = vmatmul.mubr.f32.gmra.mrb[0].mxu0 %v952
    %v2054 = vpop.f32.mrb[0].mxu0
    %v2055 = vadd.f32 0.0, %v2054
    %v2056 = vpop.f32.mrb[0].mxu0
    %2057 = vmatprep.mubr.f32.mxu0 0.0
    %2058 = vmatmul.mubr.f32.gmra.mrb[0].mxu0 %v955
    %v2059 = vpop.f32.mrb[0].mxu0
    %v2060 = vadd.f32 0.0, %v2059
    %v2061 = vpop.f32.mrb[0].mxu0
    %2062 = vdwg.mxu0
    %2063 = vmatprep.subr.mxu0 0.0
    %2064 = vmatpush1.msra.mxu0 %v1984
    %2065 = vmatprep.subr.mxu0 0.0
    %2066 = vmatpush1.msra.mxu0 %v1985
    %2067 = vmatprep.subr.mxu0 0.0
    %2068 = vmatpush1.msra.mxu0 0.0
    %2069 = vmatprep.subr.mxu0 0.0
    %2070 = vmatpush1.msra.mxu0 0.0
    %2071 = vmatprep.subr.mxu0 0.0
    %2072 = vmatpush1.msra.mxu0 0.0
    %2073 = vmatprep.subr.mxu0 0.0
    %2074 = vmatpush1.msra.mxu0 0.0
    %2075 = vmatprep.subr.mxu0 0.0
    %2076 = vmatpush1.msra.mxu0 0.0
    %2077 = vmatprep.subr.mxu0 0.0
    %2078 = vmatpush1.msra.mxu0 0.0
    %2079 = vmatprep.subr.mxu0 0.0
    %2080 = vmatpush1.msra.mxu0 0.0
    %2081 = vmatprep.subr.mxu0 0.0
    %2082 = vmatpush1.msra.mxu0 0.0
    %2083 = vmatprep.subr.mxu0 0.0
    %2084 = vmatpush1.msra.mxu0 0.0
    %2085 = vmatprep.subr.mxu0 0.0
    %2086 = vmatpush1.msra.mxu0 0.0
    %2087 = vmatprep.subr.mxu0 0.0
    %2088 = vmatpush1.msra.mxu0 0.0
    %2089 = vmatprep.subr.mxu0 0.0
    %2090 = vmatpush1.msra.mxu0 0.0
    %2091 = vmatprep.subr.mxu0 0.0
    %2092 = vmatpush1.msra.mxu0 0.0
    %2093 = vmatprep.subr.mxu0 0.0
    %2094 = vmatpush1.msra.mxu0 0.0
    %2095 = vmatprep.subr.mxu0 0.0
    %2096 = vmatpush1.msra.mxu0 0.0
    %2097 = vmatprep.subr.mxu0 0.0
    %2098 = vmatpush1.msra.mxu0 0.0
    %2099 = vmatprep.subr.mxu0 0.0
    %2100 = vmatpush1.msra.mxu0 0.0
    %2101 = vmatprep.subr.mxu0 0.0
    %2102 = vmatpush1.msra.mxu0 0.0
    %2103 = vmatprep.subr.mxu0 0.0
    %2104 = vmatpush1.msra.mxu0 0.0
    %2105 = vmatprep.subr.mxu0 0.0
    %2106 = vmatpush1.msra.mxu0 0.0
    %2107 = vmatprep.subr.mxu0 0.0
    %2108 = vmatpush1.msra.mxu0 0.0
    %2109 = vmatprep.subr.mxu0 0.0
    %2110 = vmatpush1.msra.mxu0 0.0
    %2111 = vmatprep.subr.mxu0 0.0
    %2112 = vmatpush1.msra.mxu0 0.0
    %2113 = vmatprep.subr.mxu0 0.0
    %2114 = vmatpush1.msra.mxu0 0.0
    %2115 = vmatprep.subr.mxu0 0.0
    %2116 = vmatpush1.msra.mxu0 0.0
    %2117 = vmatprep.subr.mxu0 0.0
    %2118 = vmatpush1.msra.mxu0 0.0
    %2119 = vmatprep.subr.mxu0 0.0
    %2120 = vmatpush1.msra.mxu0 0.0
    %2121 = vmatprep.subr.mxu0 0.0
    %2122 = vmatpush1.msra.mxu0 0.0
    %2123 = vmatprep.subr.mxu0 0.0
    %2124 = vmatpush1.msra.mxu0 0.0
    %2125 = vmatprep.subr.mxu0 0.0
    %2126 = vmatpush1.msra.mxu0 0.0
    %2127 = vmatprep.mubr.f32.mxu0 0.0
    %2128 = vmatmul.mubr.f32.gmra.mrb[0].mxu0 %v1033
    %v2129 = vpop.f32.mrb[0].mxu0
    %v2130 = vadd.f32 0.0, %v2129
    %v2131 = vpop.f32.mrb[0].mxu0
    %2132 = vmatprep.mubr.f32.mxu0 0.0
    %2133 = vmatmul.mubr.f32.gmra.mrb[0].mxu0 %v1036
    %v2134 = vpop.f32.mrb[0].mxu0
    %v2135 = vadd.f32 0.0, %v2134
    %v2136 = vpop.f32.mrb[0].mxu0
    %2137 = vdwg.mxu0
    %2138 = vmatprep.subr.mxu0 0.0
    %2139 = vmatpush1.msra.mxu0 %v1986
    %2140 = vmatprep.subr.mxu0 0.0
    %2141 = vmatpush1.msra.mxu0 %v1987
    %2142 = vmatprep.subr.mxu0 0.0
    %2143 = vmatpush1.msra.mxu0 0.0
    %2144 = vmatprep.subr.mxu0 0.0
    %2145 = vmatpush1.msra.mxu0 0.0
    %2146 = vmatprep.subr.mxu0 0.0
    %2147 = vmatpush1.msra.mxu0 0.0
    %2148 = vmatprep.subr.mxu0 0.0
    %2149 = vmatpush1.msra.mxu0 0.0
    %2150 = vmatprep.subr.mxu0 0.0
    %2151 = vmatpush1.msra.mxu0 0.0
    %2152 = vmatprep.subr.mxu0 0.0
    %2153 = vmatpush1.msra.mxu0 0.0
    %2154 = vmatprep.subr.mxu0 0.0
    %2155 = vmatpush1.msra.mxu0 0.0
    %2156 = vmatprep.subr.mxu0 0.0
    %2157 = vmatpush1.msra.mxu0 0.0
    %2158 = vmatprep.subr.mxu0 0.0
    %2159 = vmatpush1.msra.mxu0 0.0
    %2160 = vmatprep.subr.mxu0 0.0
    %2161 = vmatpush1.msra.mxu0 0.0
    %2162 = vmatprep.subr.mxu0 0.0
    %2163 = vmatpush1.msra.mxu0 0.0
    %2164 = vmatprep.subr.mxu0 0.0
    %2165 = vmatpush1.msra.mxu0 0.0
    %2166 = vmatprep.subr.mxu0 0.0
    %2167 = vmatpush1.msra.mxu0 0.0
    %2168 = vmatprep.subr.mxu0 0.0
    %2169 = vmatpush1.msra.mxu0 0.0
    %2170 = vmatprep.subr.mxu0 0.0
    %2171 = vmatpush1.msra.mxu0 0.0
    %2172 = vmatprep.subr.mxu0 0.0
    %2173 = vmatpush1.msra.mxu0 0.0
    %2174 = vmatprep.subr.mxu0 0.0
    %2175 = vmatpush1.msra.mxu0 0.0
    %2176 = vmatprep.subr.mxu0 0.0
    %2177 = vmatpush1.msra.mxu0 0.0
    %2178 = vmatprep.subr.mxu0 0.0
    %2179 = vmatpush1.msra.mxu0 0.0
    %2180 = vmatprep.subr.mxu0 0.0
    %2181 = vmatpush1.msra.mxu0 0.0
    %2182 = vmatprep.subr.mxu0 0.0
    %2183 = vmatpush1.msra.mxu0 0.0
    %2184 = vmatprep.subr.mxu0 0.0
    %2185 = vmatpush1.msra.mxu0 0.0
    %2186 = vmatprep.subr.mxu0 0.0
    %2187 = vmatpush1.msra.mxu0 0.0
    %2188 = vmatprep.subr.mxu0 0.0
    %2189 = vmatpush1.msra.mxu0 0.0
    %2190 = vmatprep.subr.mxu0 0.0
    %2191 = vmatpush1.msra.mxu0 0.0
    %2192 = vmatprep.subr.mxu0 0.0
    %2193 = vmatpush1.msra.mxu0 0.0
    %2194 = vmatprep.subr.mxu0 0.0
    %2195 = vmatpush1.msra.mxu0 0.0
    %2196 = vmatprep.subr.mxu0 0.0
    %2197 = vmatpush1.msra.mxu0 0.0
    %2198 = vmatprep.subr.mxu0 0.0
    %2199 = vmatpush1.msra.mxu0 0.0
    %2200 = vmatprep.subr.mxu0 0.0
    %2201 = vmatpush1.msra.mxu0 0.0
    %2202 = vmatprep.mubr.f32.mxu0 0.0
    %2203 = vmatmul.mubr.f32.gmra.mrb[0].mxu0 %v1114
    %v2204 = vpop.f32.mrb[0].mxu0
    %v2205 = vadd.f32 0.0, %v2204
    %v2206 = vpop.f32.mrb[0].mxu0
    %2207 = vmatprep.mubr.f32.mxu0 0.0
    %2208 = vmatmul.mubr.f32.gmra.mrb[0].mxu0 %v1117
    %v2209 = vpop.f32.mrb[0].mxu0
    %v2210 = vadd.f32 0.0, %v2209
    %v2211 = vpop.f32.mrb[0].mxu0
    %2212 = vdwg.mxu0
    %v2213 = vsub.f32 %v2055, %v2130
    %v2214 = vsub.f32 %v2060, %v2135
    %v2215 = vsub.f32 %v2205, %v2055
    %v2216 = vsub.f32 %v2210, %v2060
    %v2217 = vsub.f32 %v2215, %v2130
    %v2218 = vsub.f32 %v2216, %v2135
    %v2219 = vadd.f32 %v2213, %v2217
    %v2220 = vadd.f32 %v2214, %v2218
    %v2222 = vsel %vm518, %v2213, 0
    %v2225 = vsel %vm518, %v2214, 0
    %2227 = vmatprep.subr.mxu0 0.0
    %2228 = vmatpush1.xpose.msra.mxu0 %v952
    %2229 = vmatprep.subr.mxu0 0.0
    %2230 = vmatpush1.xpose.msra.mxu0 %v955
    %2231 = vmatprep.subr.mxu0 0.0
    %2232 = vmatpush1.xpose.msra.mxu0 0.0
    %2233 = vmatprep.subr.mxu0 0.0
    %2234 = vmatpush1.xpose.msra.mxu0 0.0
    %2235 = vmatprep.subr.mxu0 0.0
    %2236 = vmatpush1.xpose.msra.mxu0 0.0
    %2237 = vmatprep.subr.mxu0 0.0
    %2238 = vmatpush1.xpose.msra.mxu0 0.0
    %2239 = vmatprep.subr.mxu0 0.0
    %2240 = vmatpush1.xpose.msra.mxu0 0.0
    %2241 = vmatprep.subr.mxu0 0.0
    %2242 = vmatpush1.xpose.msra.mxu0 0.0
    %2243 = vmatprep.subr.mxu0 0.0
    %2244 = vmatpush1.xpose.msra.mxu0 0.0
    %2245 = vmatprep.subr.mxu0 0.0
    %2246 = vmatpush1.xpose.msra.mxu0 0.0
    %2247 = vmatprep.subr.mxu0 0.0
    %2248 = vmatpush1.xpose.msra.mxu0 0.0
    %2249 = vmatprep.subr.mxu0 0.0
    %2250 = vmatpush1.xpose.msra.mxu0 0.0
    %2251 = vmatprep.subr.mxu0 0.0
    %2252 = vmatpush1.xpose.msra.mxu0 0.0
    %2253 = vmatprep.subr.mxu0 0.0
    %2254 = vmatpush1.xpose.msra.mxu0 0.0
    %2255 = vmatprep.subr.mxu0 0.0
    %2256 = vmatpush1.xpose.msra.mxu0 0.0
    %2257 = vmatprep.subr.mxu0 0.0
    %2258 = vmatpush1.xpose.msra.mxu0 0.0
    %2259 = vmatprep.subr.mxu0 0.0
    %2260 = vmatpush1.xpose.msra.mxu0 0.0
    %2261 = vmatprep.subr.mxu0 0.0
    %2262 = vmatpush1.xpose.msra.mxu0 0.0
    %2263 = vmatprep.subr.mxu0 0.0
    %2264 = vmatpush1.xpose.msra.mxu0 0.0
    %2265 = vmatprep.subr.mxu0 0.0
    %2266 = vmatpush1.xpose.msra.mxu0 0.0
    %2267 = vmatprep.subr.mxu0 0.0
    %2268 = vmatpush1.xpose.msra.mxu0 0.0
    %2269 = vmatprep.subr.mxu0 0.0
    %2270 = vmatpush1.xpose.msra.mxu0 0.0
    %2271 = vmatprep.subr.mxu0 0.0
    %2272 = vmatpush1.xpose.msra.mxu0 0.0
    %2273 = vmatprep.subr.mxu0 0.0
    %2274 = vmatpush1.xpose.msra.mxu0 0.0
    %2275 = vmatprep.subr.mxu0 0.0
    %2276 = vmatpush1.xpose.msra.mxu0 0.0
    %2277 = vmatprep.subr.mxu0 0.0
    %2278 = vmatpush1.xpose.msra.mxu0 0.0
    %2279 = vmatprep.subr.mxu0 0.0
    %2280 = vmatpush1.xpose.msra.mxu0 0.0
    %2281 = vmatprep.subr.mxu0 0.0
    %2282 = vmatpush1.xpose.msra.mxu0 0.0
    %2283 = vmatprep.subr.mxu0 0.0
    %2284 = vmatpush1.xpose.msra.mxu0 0.0
    %2285 = vmatprep.subr.mxu0 0.0
    %2286 = vmatpush1.xpose.msra.mxu0 0.0
    %2287 = vmatprep.subr.mxu0 0.0
    %2288 = vmatpush1.xpose.msra.mxu0 0.0
    %2289 = vmatprep.subr.mxu0 0.0
    %2290 = vmatpush1.xpose.msra.mxu0 0.0
    %2291 = vmatprep.mubr.f32.mxu0 0.0
    %2292 = vmatmul.mubr.f32.gmra.mrb[0].mxu0 %v2222
    %v2293 = vpop.f32.mrb[0].mxu0
    %v2294 = vadd.f32 0.0, %v2293
    %v2295 = vpop.f32.mrb[0].mxu0
    %2296 = vmatprep.mubr.f32.mxu0 0.0
    %2297 = vmatmul.mubr.f32.gmra.mrb[0].mxu0 %v2225
    %v2298 = vpop.f32.mrb[0].mxu0
    %v2299 = vadd.f32 0.0, %v2298
    %v2300 = vpop.f32.mrb[0].mxu0
    %2301 = vdwg.mxu0
    %v2303 = vsel %vm518, %v2217, 0
    %v2306 = vsel %vm518, %v2218, 0
    %2308 = vmatprep.subr.mxu0 0.0
    %2309 = vmatpush1.xpose.msra.mxu0 %v1033
    %2310 = vmatprep.subr.mxu0 0.0
    %2311 = vmatpush1.xpose.msra.mxu0 %v1036
    %2312 = vmatprep.subr.mxu0 0.0
    %2313 = vmatpush1.xpose.msra.mxu0 0.0
    %2314 = vmatprep.subr.mxu0 0.0
    %2315 = vmatpush1.xpose.msra.mxu0 0.0
    %2316 = vmatprep.subr.mxu0 0.0
    %2317 = vmatpush1.xpose.msra.mxu0 0.0
    %2318 = vmatprep.subr.mxu0 0.0
    %2319 = vmatpush1.xpose.msra.mxu0 0.0
    %2320 = vmatprep.subr.mxu0 0.0
    %2321 = vmatpush1.xpose.msra.mxu0 0.0
    %2322 = vmatprep.subr.mxu0 0.0
    %2323 = vmatpush1.xpose.msra.mxu0 0.0
    %2324 = vmatprep.subr.mxu0 0.0
    %2325 = vmatpush1.xpose.msra.mxu0 0.0
    %2326 = vmatprep.subr.mxu0 0.0
    %2327 = vmatpush1.xpose.msra.mxu0 0.0
    %2328 = vmatprep.subr.mxu0 0.0
    %2329 = vmatpush1.xpose.msra.mxu0 0.0
    %2330 = vmatprep.subr.mxu0 0.0
    %2331 = vmatpush1.xpose.msra.mxu0 0.0
    %2332 = vmatprep.subr.mxu0 0.0
    %2333 = vmatpush1.xpose.msra.mxu0 0.0
    %2334 = vmatprep.subr.mxu0 0.0
    %2335 = vmatpush1.xpose.msra.mxu0 0.0
    %2336 = vmatprep.subr.mxu0 0.0
    %2337 = vmatpush1.xpose.msra.mxu0 0.0
    %2338 = vmatprep.subr.mxu0 0.0
    %2339 = vmatpush1.xpose.msra.mxu0 0.0
    %2340 = vmatprep.subr.mxu0 0.0
    %2341 = vmatpush1.xpose.msra.mxu0 0.0
    %2342 = vmatprep.subr.mxu0 0.0
    %2343 = vmatpush1.xpose.msra.mxu0 0.0
    %2344 = vmatprep.subr.mxu0 0.0
    %2345 = vmatpush1.xpose.msra.mxu0 0.0
    %2346 = vmatprep.subr.mxu0 0.0
    %2347 = vmatpush1.xpose.msra.mxu0 0.0
    %2348 = vmatprep.subr.mxu0 0.0
    %2349 = vmatpush1.xpose.msra.mxu0 0.0
    %2350 = vmatprep.subr.mxu0 0.0
    %2351 = vmatpush1.xpose.msra.mxu0 0.0
    %2352 = vmatprep.subr.mxu0 0.0
    %2353 = vmatpush1.xpose.msra.mxu0 0.0
    %2354 = vmatprep.subr.mxu0 0.0
    %2355 = vmatpush1.xpose.msra.mxu0 0.0
    %2356 = vmatprep.subr.mxu0 0.0
    %2357 = vmatpush1.xpose.msra.mxu0 0.0
    %2358 = vmatprep.subr.mxu0 0.0
    %2359 = vmatpush1.xpose.msra.mxu0 0.0
    %2360 = vmatprep.subr.mxu0 0.0
    %2361 = vmatpush1.xpose.msra.mxu0 0.0
    %2362 = vmatprep.subr.mxu0 0.0
    %2363 = vmatpush1.xpose.msra.mxu0 0.0
    %2364 = vmatprep.subr.mxu0 0.0
    %2365 = vmatpush1.xpose.msra.mxu0 0.0
    %2366 = vmatprep.subr.mxu0 0.0
    %2367 = vmatpush1.xpose.msra.mxu0 0.0
    %2368 = vmatprep.subr.mxu0 0.0
    %2369 = vmatpush1.xpose.msra.mxu0 0.0
    %2370 = vmatprep.subr.mxu0 0.0
    %2371 = vmatpush1.xpose.msra.mxu0 0.0
    %2372 = vmatprep.mubr.f32.mxu0 0.0
    %2373 = vmatmul.mubr.f32.gmra.mrb[0].mxu0 %v2303
    %v2374 = vpop.f32.mrb[0].mxu0
    %v2375 = vadd.f32 0.0, %v2374
    %v2376 = vpop.f32.mrb[0].mxu0
    %2377 = vmatprep.mubr.f32.mxu0 0.0
    %2378 = vmatmul.mubr.f32.gmra.mrb[0].mxu0 %v2306
    %v2379 = vpop.f32.mrb[0].mxu0
    %v2380 = vadd.f32 0.0, %v2379
    %v2381 = vpop.f32.mrb[0].mxu0
    %2382 = vdwg.mxu0
    %v2384 = vsel %vm518, %v2219, 0
    %v2387 = vsel %vm518, %v2220, 0
    %2389 = vmatprep.subr.mxu0 0.0
    %2390 = vmatpush1.xpose.msra.mxu0 %v1114
    %2391 = vmatprep.subr.mxu0 0.0
    %2392 = vmatpush1.xpose.msra.mxu0 %v1117
    %2393 = vmatprep.subr.mxu0 0.0
    %2394 = vmatpush1.xpose.msra.mxu0 0.0
    %2395 = vmatprep.subr.mxu0 0.0
    %2396 = vmatpush1.xpose.msra.mxu0 0.0
    %2397 = vmatprep.subr.mxu0 0.0
    %2398 = vmatpush1.xpose.msra.mxu0 0.0
    %2399 = vmatprep.subr.mxu0 0.0
    %2400 = vmatpush1.xpose.msra.mxu0 0.0
    %2401 = vmatprep.subr.mxu0 0.0
    %2402 = vmatpush1.xpose.msra.mxu0 0.0
    %2403 = vmatprep.subr.mxu0 0.0
    %2404 = vmatpush1.xpose.msra.mxu0 0.0
    %2405 = vmatprep.subr.mxu0 0.0
    %2406 = vmatpush1.xpose.msra.mxu0 0.0
    %2407 = vmatprep.subr.mxu0 0.0
    %2408 = vmatpush1.xpose.msra.mxu0 0.0
    %2409 = vmatprep.subr.mxu0 0.0
    %2410 = vmatpush1.xpose.msra.mxu0 0.0
    %2411 = vmatprep.subr.mxu0 0.0
    %2412 = vmatpush1.xpose.msra.mxu0 0.0
    %2413 = vmatprep.subr.mxu0 0.0
    %2414 = vmatpush1.xpose.msra.mxu0 0.0
    %2415 = vmatprep.subr.mxu0 0.0
    %2416 = vmatpush1.xpose.msra.mxu0 0.0
    %2417 = vmatprep.subr.mxu0 0.0
    %2418 = vmatpush1.xpose.msra.mxu0 0.0
    %2419 = vmatprep.subr.mxu0 0.0
    %2420 = vmatpush1.xpose.msra.mxu0 0.0
    %2421 = vmatprep.subr.mxu0 0.0
    %2422 = vmatpush1.xpose.msra.mxu0 0.0
    %2423 = vmatprep.subr.mxu0 0.0
    %2424 = vmatpush1.xpose.msra.mxu0 0.0
    %2425 = vmatprep.subr.mxu0 0.0
    %2426 = vmatpush1.xpose.msra.mxu0 0.0
    %2427 = vmatprep.subr.mxu0 0.0
    %2428 = vmatpush1.xpose.msra.mxu0 0.0
    %2429 = vmatprep.subr.mxu0 0.0
    %2430 = vmatpush1.xpose.msra.mxu0 0.0
    %2431 = vmatprep.subr.mxu0 0.0
    %2432 = vmatpush1.xpose.msra.mxu0 0.0
    %2433 = vmatprep.subr.mxu0 0.0
    %2434 = vmatpush1.xpose.msra.mxu0 0.0
    %2435 = vmatprep.subr.mxu0 0.0
    %2436 = vmatpush1.xpose.msra.mxu0 0.0
    %2437 = vmatprep.subr.mxu0 0.0
    %2438 = vmatpush1.xpose.msra.mxu0 0.0
    %2439 = vmatprep.subr.mxu0 0.0
    %2440 = vmatpush1.xpose.msra.mxu0 0.0
    %2441 = vmatprep.subr.mxu0 0.0
    %2442 = vmatpush1.xpose.msra.mxu0 0.0
    %2443 = vmatprep.subr.mxu0 0.0
    %2444 = vmatpush1.xpose.msra.mxu0 0.0
    %2445 = vmatprep.subr.mxu0 0.0
    %2446 = vmatpush1.xpose.msra.mxu0 0.0
    %2447 = vmatprep.subr.mxu0 0.0
    %2448 = vmatpush1.xpose.msra.mxu0 0.0
    %2449 = vmatprep.subr.mxu0 0.0
    %2450 = vmatpush1.xpose.msra.mxu0 0.0
    %2451 = vmatprep.subr.mxu0 0.0
    %2452 = vmatpush1.xpose.msra.mxu0 0.0
    %2453 = vmatprep.mubr.f32.mxu0 0.0
    %2454 = vmatmul.mubr.f32.gmra.mrb[0].mxu0 %v2384
    %v2455 = vpop.f32.mrb[0].mxu0
    %v2456 = vadd.f32 0.0, %v2455
    %v2457 = vpop.f32.mrb[0].mxu0
    %2458 = vmatprep.mubr.f32.mxu0 0.0
    %2459 = vmatmul.mubr.f32.gmra.mrb[0].mxu0 %v2387
    %v2460 = vpop.f32.mrb[0].mxu0
    %v2461 = vadd.f32 0.0, %v2460
    %v2462 = vpop.f32.mrb[0].mxu0
    %2463 = vdwg.mxu0
    %v2464 = vsub.f32 %v2294, %v2375
    %v2465 = vsub.f32 %v2299, %v2380
    %v2466 = vsub.f32 %v2456, %v2294
    %v2467 = vsub.f32 %v2461, %v2299
    %v2468 = vsub.f32 %v2466, %v2375
    %v2469 = vsub.f32 %v2467, %v2380
    %v2470 = vmul.f32 %v2464, %v2464
    %v2471 = vmul.f32 %v2465, %v2465
    %v2472 = vmul.f32 %v2468, %v2468
    %v2473 = vmul.f32 %v2469, %v2469
    %v2474 = vadd.f32 %v2470, %v2472
    %v2475 = vadd.f32 %v2471, %v2473
    %s2476 = scalar_lea.vmem [#allocation6], 16
    %2477 = vst.msk [vmem:[%s2476] sm:$0xff] %vm518, %v2474
    %2478 = vst.msk [vmem:[%s2476 + $0x8] sm:$0xff] %vm518, %v2475
    %v2479 = vld [vmem:[#allocation6] sm:$0xff]
    %v2480 = vld [vmem:[#allocation6 + $0x8] sm:$0xff]
    %v2481 = vld [vmem:[#allocation6 + $0x10] sm:$0xff]
    %v2482 = vld [vmem:[#allocation6 + $0x18] sm:$0xff]
    %v2483 = vsel %vm518, %v2479, -inf
    %v2484 = vsel %vm518, %v2480, -inf
    %v2485 = vsel %vm518, %v2481, -inf
    %v2486 = vsel %vm518, %v2482, -inf
    %v2487 = vmax.f32 %v2483, %v2484
    %v2488 = vmax.f32 %v2485, %v2486
    %v2489 = vmax.f32 %v2487, %v2488
    %2490 = vmax.xlane.f32.xlu0 %v2489
    %v2491 = vpop.xlane.xlu0 %2490
    %v2492 = vrot.slane %v2491, 4
    %v2493 = vmax.f32 %v2491, %v2492
    %v2494 = vrot.slane %v2493, 2
    %v2495 = vmax.f32 %v2493, %v2494
    %v2496 = vrot.slane %v2495, 1
    %v2497 = vmax.f32 %v2495, %v2496
    %s2498 = vtos %v2497
    %v2499 = vstv %s2498
    %v2500 = vrcp.pop %v2499
    %v2501 = vmul.f32 %v2479, %v2500
    %v2502 = vmul.f32 %v2480, %v2500
    %v2503 = vmul.f32 %v2481, %v2500
    %v2504 = vmul.f32 %v2482, %v2500
    %2505 = vst.msk [vmem:[#allocation6] sm:$0xff] %vm518, %v2501
    %2506 = vst.msk [vmem:[#allocation6 + $0x8] sm:$0xff] %vm518, %v2502
    %2507 = vst.msk [vmem:[#allocation6 + $0x10] sm:$0xff] %vm518, %v2503
    %2508 = vst.msk [vmem:[#allocation6 + $0x18] sm:$0xff] %vm518, %v2504
    // Predicated region
    $region50: #{_forward_impl.1} parent=1 // pred_check
      _
    $region51: #{_forward_impl.1} parent=1 // pred_check_branch
      %2510 = sbr.rel (0) target = $region53
    $region52: #{_forward_impl.1} parent=1 // pred_region
      %s2512 = ssub.s32 32, 32
      %2513 = vsyncadd [#allocation3], %s2512
      %s2515 = sshll.u32 [#allocation2], 4
      %s2516 = int_to_ptr.vmem [resolvable:$true] %s2515
      %2518 = dma.vmem_to_hbm [thread:$0]  %s2516, 32, %s12, [#allocation3]
    $region53: #{_forward_impl.1} parent=1 // pred_fallthru
      _
    // Predicated region
    $region54: #{_forward_impl.1} parent=1 // pred_check
      _
    $region55: #{_forward_impl.1} parent=1 // pred_check_branch
      %2520 = sbr.rel (0) target = $region57
    $region56: #{_forward_impl.1} parent=1 // pred_region
      %s2522 = ssub.s32 512, 512
      %2523 = vsyncadd [#allocation5], %s2522
      %s2524 = sshll.u32 [#allocation4], 4
      %s2525 = int_to_ptr.vmem [resolvable:$true] %s2524
      %2530 = dma.vmem_to_hbm [thread:$0]  %s2525, 512, %s13, [#allocation5], 128, 128, 8
    $region57: #{_forward_impl.1} parent=1 // pred_fallthru
      _
    // Predicated region
    $region58: #{_forward_impl.1} parent=1 // pred_check
      _
    $region59: #{_forward_impl.1} parent=1 // pred_check_branch
      %2532 = sbr.rel (0) target = $region61
    $region60: #{_forward_impl.1} parent=1 // pred_region
      %s2534 = ssub.s32 512, 512
      %2535 = vsyncadd [#allocation5], %s2534
      %s2536 = sshll.u32 [#allocation6], 4
      %s2537 = int_to_ptr.vmem [resolvable:$true] %s2536
      %2542 = dma.vmem_to_hbm [thread:$0]  %s2537, 512, %s14, [#allocation5], 128, 128, 8
    $region61: #{_forward_impl.1} parent=1 // pred_fallthru
      _
    // Predicated region
    $region62: #{_forward_impl.1} parent=1 // pred_check
      _
    $region63: #{_forward_impl.1} parent=1 // pred_check_branch
      %2544 = sbr.rel (0) target = $region65
    $region64: #{_forward_impl.1} parent=1 // pred_region
      %2545 = dma.done [#allocation3], 32
    $region65: #{_forward_impl.1} parent=1 // pred_fallthru
      _
    // Predicated region
    $region66: #{_forward_impl.1} parent=1 // pred_check
      _
    $region67: #{_forward_impl.1} parent=1 // pred_check_branch
      %2547 = sbr.rel (0) target = $region69
    $region68: #{_forward_impl.1} parent=1 // pred_region
      %2548 = dma.done [#allocation5], 512
    $region69: #{_forward_impl.1} parent=1 // pred_fallthru
      _
    // Predicated region
    $region70: #{_forward_impl.1} parent=1 // pred_check
      _
    $region71: #{_forward_impl.1} parent=1 // pred_check_branch
      %2550 = sbr.rel (0) target = $region73
    $region72: #{_forward_impl.1} parent=1 // pred_region
      %2551 = dma.done [#allocation5], 512
    $region73: #{_forward_impl.1} parent=1 // pred_fallthru
      _
    %2552 = vsyncpa [#allocation3], 1
    %2553 = vsyncpa [#allocation5], 1

</llo_original>
